<compile_context>
chip_gen: v7x
topology: tpu7x:2x2x1
jax: 0.10.0
libtpu: 0.0.40
codegen_flags: <defaults>
</compile_context>

<pallas_src>
import numpy as np
import jax
import jax.numpy as jnp
from jax import lax
from jax.experimental import pallas as pl
from jax.experimental.pallas import tpu as pltpu


def _round_up(x, m):
    return (x + m - 1) // m * m


# ---------------------------------------------------------------------------
# Generation-aware VMEM budgeting
# ---------------------------------------------------------------------------
def _vmem_caps():
    cap = 64 * 1024 * 1024                 # conservative default (v7x per-core)
    try:
        info = pltpu.get_tpu_info()
        c = int(getattr(info, "vmem_capacity_bytes", 0) or 0)
        if c > 0:
            cap = c
    except Exception:
        pass
    limit = max(32 * 1024 * 1024, min(int(cap * 0.85), cap - (8 << 20)))
    budget = int(limit * 0.80)
    return budget, limit


def _pick_tm(m, per_tm_bytes, fixed_bytes, budget_bytes, *, min_steps=8,
             tm_max=4096):
    """Largest lane-tile (multiple of 128) fitting the VMEM budget, capped so
    the 1-D grid still has ~min_steps steps (megacore load balance)."""
    mp128 = _round_up(max(int(m), 1), 128)
    avail = budget_bytes - fixed_bytes
    if avail < per_tm_bytes * 128:
        raise ValueError(
            "Residual_Block Pallas kernel: a 128-wide M tile does not fit the "
            f"per-core VMEM budget ({per_tm_bytes * 128 + fixed_bytes} B "
            f"needed, {budget_bytes} B available). "
            "TODO(synk): split channels across a second grid axis.")
    tm_budget = (avail // per_tm_bytes) // 128 * 128
    steps_possible = max(1, mp128 // 128)
    want = min(min_steps, steps_possible)
    tm_cap = max(128, (mp128 // want) // 128 * 128)
    return int(max(128, min(tm_budget, tm_cap, tm_max, mp128)))


def _full_spec(shape):
    zeros = (0,) * len(shape)
    return pl.BlockSpec(shape, lambda i: zeros)


# ---------------------------------------------------------------------------
# Small-channel (VPU scalar-broadcast) kernel — layout (C, W, TM)
# ---------------------------------------------------------------------------
def _make_scalar_kernel(C, OUT, W, PMAX, TM, plan, fused):
    MIDC = OUT if fused else C
    Wp = W + 2 * PMAX
    n_w = sum(1 for cv in plan if cv.get("op") != "pool")

    def kernel(*refs):
        x_ref = refs[0]
        wrefs = refs[1:1 + 2 * n_w:2]
        brefs = refs[2:2 + 2 * n_w:2]
        out_ref = refs[1 + 2 * n_w]
        scratch = refs[2 + 2 * n_w]

        base_of = {"x": 0, "mid": C, "xslot": 0}

        # Halos re-zeroed every step: scratch persists across grid steps and a
        # program_id==0 gate would be wrong under megacore sharding.  Only the
        # 2*PMAX halo rows are touched; the valid region is always rewritten.
        if PMAX > 0:
            zh = jnp.zeros((PMAX, TM), jnp.float32)
            for s in range(C + MIDC):
                scratch[s, 0:PMAX, :] = zh
                scratch[s, PMAX + W:Wp, :] = zh

        # Stage x into padded scratch channels [0, C).
        for ci in range(C):
            scratch[ci, PMAX:PMAX + W, :] = x_ref[ci].astype(jnp.float32)

        def run_conv(w_sm, pb_ref, sbase, cin, cout, k, emit):
            # Hoist each tap-shifted source slice once per (ci, tap) and reuse
            # it across a vreg-budgeted block of output-channel accumulators.
            pad = (k - 1) // 2
            vregs_per_acc = max(1, ((W + 7) // 8) * ((TM + 127) // 128))
            blk = max(1, min(cout, max(1, 40 // vregs_per_acc)))
            for co0 in range(0, cout, blk):
                nb = min(blk, cout - co0)

                def mac(ci, accs, _co0=co0, _nb=nb, _k=k, _pad=pad,
                        _cin=cin, _sbase=sbase, _w=w_sm):
                    accs = list(accs)
                    for t in range(_k):
                        off = PMAX - _pad + t
                        s = scratch[_sbase + ci, off:off + W, :]
                        for b in range(_nb):
                            wv = _w[((_co0 + b) * _cin + ci) * _k + t]
                            accs[b] = accs[b] + wv * s
                    return tuple(accs)

                accs = tuple(jnp.zeros((W, TM), jnp.float32)
                             for _ in range(nb))
                if cin <= 16:
                    for ci in range(cin):             # fully unrolled
                        accs = mac(ci, accs)
                else:
                    accs = lax.fori_loop(0, cin, mac, accs, unroll=2)
                for b in range(nb):
                    co = co0 + b
                    emit(co, accs[b] + pb_ref[co])

        def emit_out(group):
            def f(co, v, _g=group):
                oc = _g * OUT + co
                res = v + x_ref[oc].astype(jnp.float32)
                out_ref[oc] = jnp.maximum(res, 0.0).astype(out_ref.dtype)
            return f

        def emit_scratch(base):
            def f(co, v, _b=base):
                scratch[_b + co, PMAX:PMAX + W, :] = v
            return f

        wi = 0
        for cv in plan:
            if cv.get("op") == "pool":
                kp = cv["k"]
                padp = (kp - 1) // 2
                for ci in range(C):
                    acc = jnp.zeros((W, TM), jnp.float32)
                    for t in range(kp):
                        off = PMAX - padp + t
                        acc = acc + scratch[ci, off:off + W, :]
                    scratch[C + ci, PMAX:PMAX + W, :] = acc * (1.0 / kp)
                continue
            dst = cv["dst"]
            if dst[0] == "out":
                emit = emit_out(dst[1])
            else:
                emit = emit_scratch(base_of[dst[0]])
            run_conv(wrefs[wi], brefs[wi], base_of[cv["src"]],
                     cv["cin"], cv["cout"], cv["k"], emit)
            wi += 1

    return kernel


# ---------------------------------------------------------------------------
# MXU kernel (in_ch >= ~64, k1 == 1) — layout (W, C, TM), batched matmul per tap
# ---------------------------------------------------------------------------
def _make_mxu_kernel(C, OUT, W, PMAX, TM, plan, cdtype):
    Wp = W + 2 * PMAX
    n_w = len(plan)

    def kernel(*refs):
        x_ref = refs[0]
        wrefs = refs[1:1 + 2 * n_w:2]
        brefs = refs[2:2 + 2 * n_w:2]
        out_ref = refs[1 + 2 * n_w]
        scr_x = refs[2 + 2 * n_w]
        scr_mid = refs[3 + 2 * n_w]

        if PMAX > 0:
            scr_x[0:PMAX, :, :] = jnp.zeros((PMAX, C, TM), cdtype)
            scr_x[PMAX + W:Wp, :, :] = jnp.zeros((PMAX, C, TM), cdtype)
            scr_mid[0:PMAX, :, :] = jnp.zeros((PMAX, OUT, TM), jnp.float32)
            scr_mid[PMAX + W:Wp, :, :] = jnp.zeros((PMAX, OUT, TM), jnp.float32)
        # Single cast at staging time; all matmul operands are then `cdtype`.
        scr_x[PMAX:PMAX + W, :, :] = x_ref[...].astype(cdtype)

        def conv(w_ref, pb_ref, src, cin, k):
            pad = (k - 1) // 2
            acc = None
            for t in range(k):
                off = PMAX - pad + t
                xs = src[off:off + W, 0:cin, :].astype(cdtype)    # (W,cin,TM)
                wt = w_ref[t]                                      # (COUT,cin)
                wt3 = jnp.broadcast_to(wt[None, :, :], (W,) + wt.shape)
                r = jnp.einsum("woc,wct->wot", wt3, xs,
                               preferred_element_type=jnp.float32)
                acc = r if acc is None else acc + r
            return acc + pb_ref[...]            # (W,COUT,TM) + (W,COUT,1)

        for idx, cv in enumerate(plan):
            src = scr_x if cv["src"] == "x" else scr_mid
            v = conv(wrefs[idx], brefs[idx], src, cv["cin"], cv["k"])
            if cv["dst"][0] == "out":
                g = cv["dst"][1]
                a, b = g * OUT, (g + 1) * OUT
                res = v + x_ref[:, a:b, :].astype(jnp.float32)
                out_ref[:, a:b, :] = jnp.maximum(res, 0.0).astype(out_ref.dtype)
            else:
                scr_mid[PMAX:PMAX + W, 0:OUT, :] = v

    return kernel


# ---------------------------------------------------------------------------
# Host-side weight folding helpers
# ---------------------------------------------------------------------------
def _positional_bias(w, b_outer, b_inner, W):
    """Exact bias profile for a folded (1x1 conv -> 1xK conv) pair: constant
    b_outer plus b_inner propagated only through taps landing inside [0, W)
    (the inner conv's output is zero-padded, so out-of-range taps must not
    pick up b_inner)."""
    O, _, K = w.shape
    pad = (K - 1) // 2
    pb = jnp.broadcast_to(b_outer.reshape(O, 1), (O, W)).astype(jnp.float32)
    if b_inner is not None:
        xs = jnp.arange(W)[None, :]
        ks = jnp.arange(K)[:, None]
        valid = ((xs + ks - pad >= 0) & (xs + ks - pad < W)).astype(jnp.float32)
        wj = jnp.einsum("ojk,j->ok", w, b_inner)            # (O, K)
        pb = pb + wj @ valid
    return pb


# ---------------------------------------------------------------------------
# Wrapper
# ---------------------------------------------------------------------------
def residual_block_pallas(x_nchw, params, *, k1, k2, k3,
                          mxu_min_cin=64, force_mxu=None,
                          compute_dtype=jnp.bfloat16, io_dtype=jnp.float32):
    N, C, H, W = x_nchw.shape
    OUT = params["w11"].shape[0]
    assert 4 * OUT == C, "residual add requires out_ch == in_ch"
    M = N * H
    PMAX = max((k1 - 1) // 2, (k2 - 1) // 2, (k3 - 1) // 2)
    Wp = W + 2 * PMAX
    fused = (k1 == 1)

    use_mxu = (C >= mxu_min_cin) if force_mxu is None else bool(force_mxu)
    if use_mxu and not fused:
        # TODO(synk): MXU path currently assumes kernel_1 == 1.
        use_mxu = False

    p = {k: jnp.asarray(v, dtype=jnp.float32) for k, v in params.items()}

    def const_pb(b):
        O = b.shape[0]
        return jnp.broadcast_to(b.reshape(O, 1), (O, W)).astype(jnp.float32)

    if fused:
        # Fold the 1x1 convs of branches 2/3 and the avg-pool (count_include_pad)
        # of the pool branch into the following convs.
        w21m = p["w21"][:, :, 0]
        w31m = p["w31"][:, :, 0]
        w22f = jnp.einsum("ojk,ji->oik", p["w22"], w21m)
        w32f = jnp.einsum("ojk,ji->oik", p["w32"], w31m)
        wpf = jnp.repeat(p["wp"] / float(k2), k2, axis=2)
        conv_arrays = [
            (wpf,      const_pb(p["bp"])),
            (p["w11"], const_pb(p["b11"])),
            (w22f,     _positional_bias(p["w22"], p["b22"], p["b21"], W)),
            (w32f,     _positional_bias(p["w32"], p["b32"], p["b31"], W)),
            (p["w33"], const_pb(p["b33"])),
        ]
        plan = [
            dict(src="x",   dst=("out", 0), k=k2, cin=C,   cout=OUT),
            dict(src="x",   dst=("out", 1), k=k1, cin=C,   cout=OUT),
            dict(src="x",   dst=("out", 2), k=k3, cin=C,   cout=OUT),
            dict(src="x",   dst=("mid",),   k=k2, cin=C,   cout=OUT),
            dict(src="mid", dst=("out", 3), k=k2, cin=OUT, cout=OUT),
        ]
    else:
        conv_arrays = [
            (p["wp"],  const_pb(p["bp"])),
            (p["w11"], const_pb(p["b11"])),
            (p["w21"], const_pb(p["b21"])),
            (p["w22"], const_pb(p["b22"])),
            (p["w31"], const_pb(p["b31"])),
            (p["w32"], const_pb(p["b32"])),
            (p["w33"], const_pb(p["b33"])),
        ]
        plan = [
            dict(op="pool", k=k2),
            dict(src="mid",   dst=("out", 0), k=k1, cin=C,   cout=OUT),
            dict(src="x",     dst=("out", 1), k=k1, cin=C,   cout=OUT),
            dict(src="x",     dst=("mid",),   k=k1, cin=C,   cout=C),
            dict(src="mid",   dst=("out", 2), k=k3, cin=C,   cout=OUT),
            dict(src="x",     dst=("mid",),   k=k1, cin=C,   cout=C),
            dict(src="mid",   dst=("xslot",), k=k2, cin=C,   cout=OUT),
            dict(src="xslot", dst=("out", 3), k=k2, cin=OUT, cout=OUT),
        ]

    MIDC = OUT if fused else C
    io_b = np.dtype(io_dtype).itemsize
    budget, vmem_limit = _vmem_caps()

    if use_mxu:
        cd_b = np.dtype(compute_dtype).itemsize
        per_tm = (2 * 2 * C * W * io_b                    # x/out double-buffers
                  + Wp * _round_up(C, 8) * cd_b           # scr_x
                  + Wp * _round_up(MIDC, 8) * 4           # scr_mid
                  + W * _round_up(C, 8) * cd_b            # tap-slice temp
                  + 3 * W * _round_up(OUT, 8) * 4)        # matmul / acc temps
        fixed = 4 << 20
        for w, _pb in conv_arrays:
            fixed += 2 * (w.shape[2] * _round_up(w.shape[0], 8)
                          * _round_up(w.shape[1], 128) * cd_b)
            fixed += 2 * _round_up(W, 8) * 128 * 4
    else:
        per_tm = (2 * 2 * C * W * io_b
                  + (C + MIDC) * _round_up(Wp, 8) * 4)
        fixed = 4 << 20

    TM = _pick_tm(M, per_tm, fixed, budget)
    Mp = _round_up(M, TM)                 # lane-dense, multiple of 128
    grid = (Mp // TM,)

    tile_shape = (W, C, TM) if use_mxu else (C, W, TM)
    in_tile = pl.BlockSpec(tile_shape, lambda i: (0, 0, i))
    out_tile = pl.BlockSpec(tile_shape, lambda i: (0, 0, i))

    if use_mxu:
        # (W, C, M): taps = free leading-axis slices, channels on sublanes.
        xk = jnp.transpose(x_nchw, (3, 1, 0, 2)).reshape(W, C, M)
        xk = jnp.pad(xk, ((0, 0), (0, 0), (0, Mp - M))).astype(io_dtype)
        flat, specs = [], []
        for w, pb in conv_arrays:
            wt = jnp.transpose(w, (2, 0, 1)).astype(compute_dtype)   # (K,O,I)
            pbt = jnp.transpose(pb, (1, 0))[:, :, None].astype(jnp.float32)
            flat += [wt, pbt]
            specs += [_full_spec(wt.shape), _full_spec(pbt.shape)]
        scratch_shapes = [pltpu.VMEM((Wp, C, TM), compute_dtype),
                          pltpu.VMEM((Wp, MIDC, TM), jnp.float32)]
        kernel = _make_mxu_kernel(C, OUT, W, PMAX, TM, plan, compute_dtype)
        out_struct = jax.ShapeDtypeStruct((W, C, Mp), io_dtype)
    else:
        # (C, W, M): conv axis W on sublanes, M on lanes.
        xk = jnp.transpose(x_nchw, (1, 3, 0, 2)).reshape(C, W, M)
        xk = jnp.pad(xk, ((0, 0), (0, 0), (0, Mp - M))).astype(io_dtype)
        flat, specs = [], []
        for w, pb in conv_arrays:
            flat += [w.reshape(-1).astype(jnp.float32),
                     pb[:, :, None].astype(jnp.float32)]
            specs += [pl.BlockSpec(memory_space=pltpu.MemorySpace.SMEM),
                      _full_spec((pb.shape[0], W, 1))]
        scratch_shapes = [pltpu.VMEM((C + MIDC, Wp, TM), jnp.float32)]
        kernel = _make_scalar_kernel(C, OUT, W, PMAX, TM, plan, fused)
        out_struct = jax.ShapeDtypeStruct((C, W, Mp), io_dtype)

    out = pl.pallas_call(
        kernel,
        out_shape=out_struct,
        grid=grid,
        in_specs=[in_tile] + specs,
        out_specs=out_tile,
        scratch_shapes=scratch_shapes,
        compiler_params=pltpu.CompilerParams(
            dimension_semantics=("parallel",),
            vmem_limit_bytes=int(vmem_limit)),
    )(xk, *flat)

    if use_mxu:
        out = jnp.transpose(out[:, :, :M].reshape(W, C, N, H), (2, 1, 3, 0))
    else:
        out = jnp.transpose(out[:, :, :M].reshape(C, W, N, H), (2, 0, 3, 1))
    return out.astype(x_nchw.dtype)


# ---------------------------------------------------------------------------
# Pure-JAX reference (mirrors the PyTorch forward)
# ---------------------------------------------------------------------------
def residual_block_ref(x, p, *, k1, k2, k3):
    def conv1xk(x, w, b, k):
        pad = (k - 1) // 2
        O, I = w.shape[0], w.shape[1]
        y = lax.conv_general_dilated(
            x, w.reshape(O, I, 1, k), (1, 1), ((0, 0), (pad, pad)),
            dimension_numbers=("NCHW", "OIHW", "NCHW"))
        return y + b.reshape(1, -1, 1, 1)

    b11 = conv1xk(x, p["w11"], p["b11"], k1)
    b21 = conv1xk(x, p["w21"], p["b21"], k1)
    b22 = conv1xk(b21, p["w22"], p["b22"], k3)
    b31 = conv1xk(x, p["w31"], p["b31"], k1)
    b32 = conv1xk(b31, p["w32"], p["b32"], k2)
    b33 = conv1xk(b32, p["w33"], p["b33"], k2)
    pad2 = (k2 - 1) // 2
    pool = lax.reduce_window(
        x, 0.0, lax.add, (1, 1, 1, k2), (1, 1, 1, 1),
        ((0, 0), (0, 0), (0, 0), (pad2, pad2))) / k2
    bp = conv1xk(pool, p["wp"], p["bp"], k1)
    out = jnp.concatenate([bp, b11, b22, b33], axis=1)
    return jax.nn.relu(out + x)


# ---------------------------------------------------------------------------
# Deterministic parameter init (shapes from Inception_Block.__init__)
# ---------------------------------------------------------------------------
def init_params(key, in_ch, out_ch, k1, k2, k3):
    out = out_ch // 4
    shapes = {
        "w11": (out, in_ch, k1),   "b11": (out,),
        "w21": (in_ch, in_ch, k1), "b21": (in_ch,),
        "w22": (out, in_ch, k3),   "b22": (out,),
        "w31": (in_ch, in_ch, k1), "b31": (in_ch,),
        "w32": (out, in_ch, k2),   "b32": (out,),
        "w33": (out, out, k2),     "b33": (out,),
        "wp":  (out, in_ch, k1),   "bp":  (out,),
    }
    params = {}
    for i, (name, shp) in enumerate(shapes.items()):
        sub = jax.random.fold_in(key, i)
        params[name] = (0.2 * jax.random.normal(sub, shp)).astype(jnp.float32)
    return params


if __name__ == "__main__":
    key = jax.random.PRNGKey(0)

    # -- Test 1: kernel_1 == 1 (folded VPU path), small module-consistent shape.
    N, C, H, W = 2, 4, 8, 16
    k1, k2, k3 = 1, 3, 5
    params = init_params(key, C, C, k1, k2, k3)
    x = jax.random.normal(jax.random.fold_in(key, 100), (N, C, H, W),
                          dtype=jnp.float32)
    out = jax.block_until_ready(
        residual_block_pallas(x, params, k1=k1, k2=k2, k3=k3))
    ref = jax.block_until_ready(
        residual_block_ref(x, params, k1=k1, k2=k2, k3=k3))
    np.testing.assert_allclose(np.asarray(out), np.asarray(ref),
                               rtol=2e-4, atol=2e-4)

    # -- Test 2: kernel_1 > 1 (general, non-folded path).
    params2 = init_params(jax.random.fold_in(key, 1), C, C, 3, k2, k3)
    out2 = jax.block_until_ready(
        residual_block_pallas(x, params2, k1=3, k2=k2, k3=k3))
    ref2 = jax.block_until_ready(
        residual_block_ref(x, params2, k1=3, k2=k2, k3=k3))
    np.testing.assert_allclose(np.asarray(out2), np.asarray(ref2),
                               rtol=2e-4, atol=2e-4)

    # -- Test 3: MXU path (taken automatically for in_ch >= 64; forced here at a
    #    small shape so it is exercised).  bf16 matmul inputs -> looser tolerance.
    N3, C3, H3, W3 = 2, 16, 8, 16
    params3 = init_params(jax.random.fold_in(key, 2), C3, C3, 1, k2, k3)
    x3 = jax.random.normal(jax.random.fold_in(key, 101), (N3, C3, H3, W3),
                           dtype=jnp.float32)
    out3 = jax.block_until_ready(
        residual_block_pallas(x3, params3, k1=1, k2=k2, k3=k3, force_mxu=True))
    ref3 = jax.block_until_ready(
        residual_block_ref(x3, params3, k1=1, k2=k2, k3=k3))
    np.testing.assert_allclose(np.asarray(out3), np.asarray(ref3),
                               rtol=3e-2, atol=3e-2)

    print("KERNEL_OK")
</pallas_src>

<mosaic_0001>
module attributes {stable_mosaic.version = 11 : i64} {
  func.func @kernel(%arg0: i32, %arg1: memref<4x16x128xf32, #tpu.memory_space<vmem>>, %arg2: memref<12xf32, #tpu.memory_space<smem>>, %arg3: memref<1x16x1xf32, #tpu.memory_space<vmem>>, %arg4: memref<4xf32, #tpu.memory_space<smem>>, %arg5: memref<1x16x1xf32, #tpu.memory_space<vmem>>, %arg6: memref<20xf32, #tpu.memory_space<smem>>, %arg7: memref<1x16x1xf32, #tpu.memory_space<vmem>>, %arg8: memref<12xf32, #tpu.memory_space<smem>>, %arg9: memref<1x16x1xf32, #tpu.memory_space<vmem>>, %arg10: memref<3xf32, #tpu.memory_space<smem>>, %arg11: memref<1x16x1xf32, #tpu.memory_space<vmem>>, %arg12: memref<4x16x128xf32, #tpu.memory_space<vmem>>, %arg13: memref<5x20x128xf32, #tpu.memory_space<vmem>>) attributes {dimension_semantics = [#tpu.dimension_semantics<parallel>], iteration_bounds = array<i64: 1>, scalar_prefetch = 0 : i64, scratch_operands = 1 : i64, tpu.core_type = #tpu.core_type<tc>, window_params = [{transform_indices = @transform_0, window_bounds = array<i64: 4, 16, 128>}, {transform_indices = @transform_1, window_bounds = array<i64: 12>}, {pipeline_mode = #tpu.pipeline_mode<synchronous>, transform_indices = @transform_2, window_bounds = array<i64: 1, 16, 1>}, {transform_indices = @transform_3, window_bounds = array<i64: 4>}, {pipeline_mode = #tpu.pipeline_mode<synchronous>, transform_indices = @transform_4, window_bounds = array<i64: 1, 16, 1>}, {transform_indices = @transform_5, window_bounds = array<i64: 20>}, {pipeline_mode = #tpu.pipeline_mode<synchronous>, transform_indices = @transform_6, window_bounds = array<i64: 1, 16, 1>}, {transform_indices = @transform_7, window_bounds = array<i64: 12>}, {pipeline_mode = #tpu.pipeline_mode<synchronous>, transform_indices = @transform_8, window_bounds = array<i64: 1, 16, 1>}, {transform_indices = @transform_9, window_bounds = array<i64: 3>}, {pipeline_mode = #tpu.pipeline_mode<synchronous>, transform_indices = @transform_10, window_bounds = array<i64: 1, 16, 1>}, {transform_indices = @transform_11, window_bounds = array<i64: 4, 16, 128>}]} {
    %cst = arith.constant 0.000000e+00 : f32
    %0 = vector.broadcast %cst : f32 to vector<2x128xf32>
    %c0 = arith.constant 0 : index
    %c0_0 = arith.constant 0 : index
    %c0_1 = arith.constant 0 : index
    %1 = vector.load %arg13[%c0, %c0_0, %c0_1] : memref<5x20x128xf32, #tpu.memory_space<vmem>>, vector<1x2x128xf32>
    %2 = vector.shape_cast %1 : vector<1x2x128xf32> to vector<2x128xf32>
    %3 = vector.shape_cast %0 : vector<2x128xf32> to vector<1x2x128xf32>
    tpu.vector_store %arg13[%c0, %c0_0, %c0_1], %3 {strides = array<i32>} : memref<5x20x128xf32, #tpu.memory_space<vmem>>, vector<1x2x128xf32>,
    %c0_2 = arith.constant 0 : index
    %c18 = arith.constant 18 : index
    %c0_3 = arith.constant 0 : index
    %4 = vector.load %arg13[%c0_2, %c18, %c0_3] : memref<5x20x128xf32, #tpu.memory_space<vmem>>, vector<1x2x128xf32>
    %5 = vector.shape_cast %4 : vector<1x2x128xf32> to vector<2x128xf32>
    %6 = vector.shape_cast %0 : vector<2x128xf32> to vector<1x2x128xf32>
    tpu.vector_store %arg13[%c0_2, %c18, %c0_3], %6 {strides = array<i32>} : memref<5x20x128xf32, #tpu.memory_space<vmem>>, vector<1x2x128xf32>,
    %c1 = arith.constant 1 : index
    %c0_4 = arith.constant 0 : index
    %c0_5 = arith.constant 0 : index
    %7 = vector.load %arg13[%c1, %c0_4, %c0_5] : memref<5x20x128xf32, #tpu.memory_space<vmem>>, vector<1x2x128xf32>
    %8 = vector.shape_cast %7 : vector<1x2x128xf32> to vector<2x128xf32>
    %9 = vector.shape_cast %0 : vector<2x128xf32> to vector<1x2x128xf32>
    tpu.vector_store %arg13[%c1, %c0_4, %c0_5], %9 {strides = array<i32>} : memref<5x20x128xf32, #tpu.memory_space<vmem>>, vector<1x2x128xf32>,
    %c1_6 = arith.constant 1 : index
    %c18_7 = arith.constant 18 : index
    %c0_8 = arith.constant 0 : index
    %10 = vector.load %arg13[%c1_6, %c18_7, %c0_8] : memref<5x20x128xf32, #tpu.memory_space<vmem>>, vector<1x2x128xf32>
    %11 = vector.shape_cast %10 : vector<1x2x128xf32> to vector<2x128xf32>
    %12 = vector.shape_cast %0 : vector<2x128xf32> to vector<1x2x128xf32>
    tpu.vector_store %arg13[%c1_6, %c18_7, %c0_8], %12 {strides = array<i32>} : memref<5x20x128xf32, #tpu.memory_space<vmem>>, vector<1x2x128xf32>,
    %c2 = arith.constant 2 : index
    %c0_9 = arith.constant 0 : index
    %c0_10 = arith.constant 0 : index
    %13 = vector.load %arg13[%c2, %c0_9, %c0_10] : memref<5x20x128xf32, #tpu.memory_space<vmem>>, vector<1x2x128xf32>
    %14 = vector.shape_cast %13 : vector<1x2x128xf32> to vector<2x128xf32>
    %15 = vector.shape_cast %0 : vector<2x128xf32> to vector<1x2x128xf32>
    tpu.vector_store %arg13[%c2, %c0_9, %c0_10], %15 {strides = array<i32>} : memref<5x20x128xf32, #tpu.memory_space<vmem>>, vector<1x2x128xf32>,
    %c2_11 = arith.constant 2 : index
    %c18_12 = arith.constant 18 : index
    %c0_13 = arith.constant 0 : index
    %16 = vector.load %arg13[%c2_11, %c18_12, %c0_13] : memref<5x20x128xf32, #tpu.memory_space<vmem>>, vector<1x2x128xf32>
    %17 = vector.shape_cast %16 : vector<1x2x128xf32> to vector<2x128xf32>
    %18 = vector.shape_cast %0 : vector<2x128xf32> to vector<1x2x128xf32>
    tpu.vector_store %arg13[%c2_11, %c18_12, %c0_13], %18 {strides = array<i32>} : memref<5x20x128xf32, #tpu.memory_space<vmem>>, vector<1x2x128xf32>,
    %c3 = arith.constant 3 : index
    %c0_14 = arith.constant 0 : index
    %c0_15 = arith.constant 0 : index
    %19 = vector.load %arg13[%c3, %c0_14, %c0_15] : memref<5x20x128xf32, #tpu.memory_space<vmem>>, vector<1x2x128xf32>
    %20 = vector.shape_cast %19 : vector<1x2x128xf32> to vector<2x128xf32>
    %21 = vector.shape_cast %0 : vector<2x128xf32> to vector<1x2x128xf32>
    tpu.vector_store %arg13[%c3, %c0_14, %c0_15], %21 {strides = array<i32>} : memref<5x20x128xf32, #tpu.memory_space<vmem>>, vector<1x2x128xf32>,
    %c3_16 = arith.constant 3 : index
    %c18_17 = arith.constant 18 : index
    %c0_18 = arith.constant 0 : index
    %22 = vector.load %arg13[%c3_16, %c18_17, %c0_18] : memref<5x20x128xf32, #tpu.memory_space<vmem>>, vector<1x2x128xf32>
    %23 = vector.shape_cast %22 : vector<1x2x128xf32> to vector<2x128xf32>
    %24 = vector.shape_cast %0 : vector<2x128xf32> to vector<1x2x128xf32>
    tpu.vector_store %arg13[%c3_16, %c18_17, %c0_18], %24 {strides = array<i32>} : memref<5x20x128xf32, #tpu.memory_space<vmem>>, vector<1x2x128xf32>,
    %c4 = arith.constant 4 : index
    %c0_19 = arith.constant 0 : index
    %c0_20 = arith.constant 0 : index
    %25 = vector.load %arg13[%c4, %c0_19, %c0_20] : memref<5x20x128xf32, #tpu.memory_space<vmem>>, vector<1x2x128xf32>
    %26 = vector.shape_cast %25 : vector<1x2x128xf32> to vector<2x128xf32>
    %27 = vector.shape_cast %0 : vector<2x128xf32> to vector<1x2x128xf32>
    tpu.vector_store %arg13[%c4, %c0_19, %c0_20], %27 {strides = array<i32>} : memref<5x20x128xf32, #tpu.memory_space<vmem>>, vector<1x2x128xf32>,
    %c4_21 = arith.constant 4 : index
    %c18_22 = arith.constant 18 : index
    %c0_23 = arith.constant 0 : index
    %28 = vector.load %arg13[%c4_21, %c18_22, %c0_23] : memref<5x20x128xf32, #tpu.memory_space<vmem>>, vector<1x2x128xf32>
    %29 = vector.shape_cast %28 : vector<1x2x128xf32> to vector<2x128xf32>
    %30 = vector.shape_cast %0 : vector<2x128xf32> to vector<1x2x128xf32>
    tpu.vector_store %arg13[%c4_21, %c18_22, %c0_23], %30 {strides = array<i32>} : memref<5x20x128xf32, #tpu.memory_space<vmem>>, vector<1x2x128xf32>,
    %c0_24 = arith.constant 0 : index
    %c0_25 = arith.constant 0 : index
    %c0_26 = arith.constant 0 : index
    %31 = vector.load %arg1[%c0_24, %c0_25, %c0_26] : memref<4x16x128xf32, #tpu.memory_space<vmem>>, vector<1x16x128xf32>
    %32 = vector.shape_cast %31 : vector<1x16x128xf32> to vector<16x128xf32>
    %c0_27 = arith.constant 0 : index
    %c2_28 = arith.constant 2 : index
    %c0_29 = arith.constant 0 : index
    %33 = vector.load %arg13[%c0_27, %c2_28, %c0_29] : memref<5x20x128xf32, #tpu.memory_space<vmem>>, vector<1x16x128xf32>
    %34 = vector.shape_cast %33 : vector<1x16x128xf32> to vector<16x128xf32>
    %35 = vector.shape_cast %32 : vector<16x128xf32> to vector<1x16x128xf32>
    tpu.vector_store %arg13[%c0_27, %c2_28, %c0_29], %35 {strides = array<i32>} : memref<5x20x128xf32, #tpu.memory_space<vmem>>, vector<1x16x128xf32>,
    %c1_30 = arith.constant 1 : index
    %c0_31 = arith.constant 0 : index
    %c0_32 = arith.constant 0 : index
    %36 = vector.load %arg1[%c1_30, %c0_31, %c0_32] : memref<4x16x128xf32, #tpu.memory_space<vmem>>, vector<1x16x128xf32>
    %37 = vector.shape_cast %36 : vector<1x16x128xf32> to vector<16x128xf32>
    %c1_33 = arith.constant 1 : index
    %c2_34 = arith.constant 2 : index
    %c0_35 = arith.constant 0 : index
    %38 = vector.load %arg13[%c1_33, %c2_34, %c0_35] : memref<5x20x128xf32, #tpu.memory_space<vmem>>, vector<1x16x128xf32>
    %39 = vector.shape_cast %38 : vector<1x16x128xf32> to vector<16x128xf32>
    %40 = vector.shape_cast %37 : vector<16x128xf32> to vector<1x16x128xf32>
    tpu.vector_store %arg13[%c1_33, %c2_34, %c0_35], %40 {strides = array<i32>} : memref<5x20x128xf32, #tpu.memory_space<vmem>>, vector<1x16x128xf32>,
    %c2_36 = arith.constant 2 : index
    %c0_37 = arith.constant 0 : index
    %c0_38 = arith.constant 0 : index
    %41 = vector.load %arg1[%c2_36, %c0_37, %c0_38] : memref<4x16x128xf32, #tpu.memory_space<vmem>>, vector<1x16x128xf32>
    %42 = vector.shape_cast %41 : vector<1x16x128xf32> to vector<16x128xf32>
    %c2_39 = arith.constant 2 : index
    %c2_40 = arith.constant 2 : index
    %c0_41 = arith.constant 0 : index
    %43 = vector.load %arg13[%c2_39, %c2_40, %c0_41] : memref<5x20x128xf32, #tpu.memory_space<vmem>>, vector<1x16x128xf32>
    %44 = vector.shape_cast %43 : vector<1x16x128xf32> to vector<16x128xf32>
    %45 = vector.shape_cast %42 : vector<16x128xf32> to vector<1x16x128xf32>
    tpu.vector_store %arg13[%c2_39, %c2_40, %c0_41], %45 {strides = array<i32>} : memref<5x20x128xf32, #tpu.memory_space<vmem>>, vector<1x16x128xf32>,
    %c3_42 = arith.constant 3 : index
    %c0_43 = arith.constant 0 : index
    %c0_44 = arith.constant 0 : index
    %46 = vector.load %arg1[%c3_42, %c0_43, %c0_44] : memref<4x16x128xf32, #tpu.memory_space<vmem>>, vector<1x16x128xf32>
    %47 = vector.shape_cast %46 : vector<1x16x128xf32> to vector<16x128xf32>
    %c3_45 = arith.constant 3 : index
    %c2_46 = arith.constant 2 : index
    %c0_47 = arith.constant 0 : index
    %48 = vector.load %arg13[%c3_45, %c2_46, %c0_47] : memref<5x20x128xf32, #tpu.memory_space<vmem>>, vector<1x16x128xf32>
    %49 = vector.shape_cast %48 : vector<1x16x128xf32> to vector<16x128xf32>
    %50 = vector.shape_cast %47 : vector<16x128xf32> to vector<1x16x128xf32>
    tpu.vector_store %arg13[%c3_45, %c2_46, %c0_47], %50 {strides = array<i32>} : memref<5x20x128xf32, #tpu.memory_space<vmem>>, vector<1x16x128xf32>,
    %cst_48 = arith.constant 0.000000e+00 : f32
    %51 = vector.broadcast %cst_48 : f32 to vector<16x128xf32>
    %c0_49 = arith.constant 0 : index
    %c1_50 = arith.constant 1 : index
    %c0_51 = arith.constant 0 : index
    %52 = vector.load %arg13[%c0_49, %c1_50, %c0_51] : memref<5x20x128xf32, #tpu.memory_space<vmem>>, vector<1x16x128xf32>
    %53 = vector.shape_cast %52 : vector<1x16x128xf32> to vector<16x128xf32>
    %c0_52 = arith.constant 0 : index
    %54 = memref.load %arg2[%c0_52] : memref<12xf32, #tpu.memory_space<smem>>
    %55 = vector.broadcast %54 : f32 to vector<16x128xf32>
    %56 = arith.mulf %55, %53 : vector<16x128xf32>
    %57 = arith.addf %51, %56 : vector<16x128xf32>
    %c0_53 = arith.constant 0 : index
    %c2_54 = arith.constant 2 : index
    %c0_55 = arith.constant 0 : index
    %58 = vector.load %arg13[%c0_53, %c2_54, %c0_55] : memref<5x20x128xf32, #tpu.memory_space<vmem>>, vector<1x16x128xf32>
    %59 = vector.shape_cast %58 : vector<1x16x128xf32> to vector<16x128xf32>
    %c1_56 = arith.constant 1 : index
    %60 = memref.load %arg2[%c1_56] : memref<12xf32, #tpu.memory_space<smem>>
    %61 = vector.broadcast %60 : f32 to vector<16x128xf32>
    %62 = arith.mulf %61, %59 : vector<16x128xf32>
    %63 = arith.addf %57, %62 : vector<16x128xf32>
    %c0_57 = arith.constant 0 : index
    %c3_58 = arith.constant 3 : index
    %c0_59 = arith.constant 0 : index
    %64 = vector.load %arg13[%c0_57, %c3_58, %c0_59] : memref<5x20x128xf32, #tpu.memory_space<vmem>>, vector<1x16x128xf32>
    %65 = vector.shape_cast %64 : vector<1x16x128xf32> to vector<16x128xf32>
    %c2_60 = arith.constant 2 : index
    %66 = memref.load %arg2[%c2_60] : memref<12xf32, #tpu.memory_space<smem>>
    %67 = vector.broadcast %66 : f32 to vector<16x128xf32>
    %68 = arith.mulf %67, %65 : vector<16x128xf32>
    %69 = arith.addf %63, %68 : vector<16x128xf32>
    %c1_61 = arith.constant 1 : index
    %c1_62 = arith.constant 1 : index
    %c0_63 = arith.constant 0 : index
    %70 = vector.load %arg13[%c1_61, %c1_62, %c0_63] : memref<5x20x128xf32, #tpu.memory_space<vmem>>, vector<1x16x128xf32>
    %71 = vector.shape_cast %70 : vector<1x16x128xf32> to vector<16x128xf32>
    %c3_64 = arith.constant 3 : index
    %72 = memref.load %arg2[%c3_64] : memref<12xf32, #tpu.memory_space<smem>>
    %73 = vector.broadcast %72 : f32 to vector<16x128xf32>
    %74 = arith.mulf %73, %71 : vector<16x128xf32>
    %75 = arith.addf %69, %74 : vector<16x128xf32>
    %c1_65 = arith.constant 1 : index
    %c2_66 = arith.constant 2 : index
    %c0_67 = arith.constant 0 : index
    %76 = vector.load %arg13[%c1_65, %c2_66, %c0_67] : memref<5x20x128xf32, #tpu.memory_space<vmem>>, vector<1x16x128xf32>
    %77 = vector.shape_cast %76 : vector<1x16x128xf32> to vector<16x128xf32>
    %c4_68 = arith.constant 4 : index
    %78 = memref.load %arg2[%c4_68] : memref<12xf32, #tpu.memory_space<smem>>
    %79 = vector.broadcast %78 : f32 to vector<16x128xf32>
    %80 = arith.mulf %79, %77 : vector<16x128xf32>
    %81 = arith.addf %75, %80 : vector<16x128xf32>
    %c1_69 = arith.constant 1 : index
    %c3_70 = arith.constant 3 : index
    %c0_71 = arith.constant 0 : index
    %82 = vector.load %arg13[%c1_69, %c3_70, %c0_71] : memref<5x20x128xf32, #tpu.memory_space<vmem>>, vector<1x16x128xf32>
    %83 = vector.shape_cast %82 : vector<1x16x128xf32> to vector<16x128xf32>
    %c5 = arith.constant 5 : index
    %84 = memref.load %arg2[%c5] : memref<12xf32, #tpu.memory_space<smem>>
    %85 = vector.broadcast %84 : f32 to vector<16x128xf32>
    %86 = arith.mulf %85, %83 : vector<16x128xf32>
    %87 = arith.addf %81, %86 : vector<16x128xf32>
    %c2_72 = arith.constant 2 : index
    %c1_73 = arith.constant 1 : index
    %c0_74 = arith.constant 0 : index
    %88 = vector.load %arg13[%c2_72, %c1_73, %c0_74] : memref<5x20x128xf32, #tpu.memory_space<vmem>>, vector<1x16x128xf32>
    %89 = vector.shape_cast %88 : vector<1x16x128xf32> to vector<16x128xf32>
    %c6 = arith.constant 6 : index
    %90 = memref.load %arg2[%c6] : memref<12xf32, #tpu.memory_space<smem>>
    %91 = vector.broadcast %90 : f32 to vector<16x128xf32>
    %92 = arith.mulf %91, %89 : vector<16x128xf32>
    %93 = arith.addf %87, %92 : vector<16x128xf32>
    %c2_75 = arith.constant 2 : index
    %c2_76 = arith.constant 2 : index
    %c0_77 = arith.constant 0 : index
    %94 = vector.load %arg13[%c2_75, %c2_76, %c0_77] : memref<5x20x128xf32, #tpu.memory_space<vmem>>, vector<1x16x128xf32>
    %95 = vector.shape_cast %94 : vector<1x16x128xf32> to vector<16x128xf32>
    %c7 = arith.constant 7 : index
    %96 = memref.load %arg2[%c7] : memref<12xf32, #tpu.memory_space<smem>>
    %97 = vector.broadcast %96 : f32 to vector<16x128xf32>
    %98 = arith.mulf %97, %95 : vector<16x128xf32>
    %99 = arith.addf %93, %98 : vector<16x128xf32>
    %c2_78 = arith.constant 2 : index
    %c3_79 = arith.constant 3 : index
    %c0_80 = arith.constant 0 : index
    %100 = vector.load %arg13[%c2_78, %c3_79, %c0_80] : memref<5x20x128xf32, #tpu.memory_space<vmem>>, vector<1x16x128xf32>
    %101 = vector.shape_cast %100 : vector<1x16x128xf32> to vector<16x128xf32>
    %c8 = arith.constant 8 : index
    %102 = memref.load %arg2[%c8] : memref<12xf32, #tpu.memory_space<smem>>
    %103 = vector.broadcast %102 : f32 to vector<16x128xf32>
    %104 = arith.mulf %103, %101 : vector<16x128xf32>
    %105 = arith.addf %99, %104 : vector<16x128xf32>
    %c3_81 = arith.constant 3 : index
    %c1_82 = arith.constant 1 : index
    %c0_83 = arith.constant 0 : index
    %106 = vector.load %arg13[%c3_81, %c1_82, %c0_83] : memref<5x20x128xf32, #tpu.memory_space<vmem>>, vector<1x16x128xf32>
    %107 = vector.shape_cast %106 : vector<1x16x128xf32> to vector<16x128xf32>
    %c9 = arith.constant 9 : index
    %108 = memref.load %arg2[%c9] : memref<12xf32, #tpu.memory_space<smem>>
    %109 = vector.broadcast %108 : f32 to vector<16x128xf32>
    %110 = arith.mulf %109, %107 : vector<16x128xf32>
    %111 = arith.addf %105, %110 : vector<16x128xf32>
    %c3_84 = arith.constant 3 : index
    %c2_85 = arith.constant 2 : index
    %c0_86 = arith.constant 0 : index
    %112 = vector.load %arg13[%c3_84, %c2_85, %c0_86] : memref<5x20x128xf32, #tpu.memory_space<vmem>>, vector<1x16x128xf32>
    %113 = vector.shape_cast %112 : vector<1x16x128xf32> to vector<16x128xf32>
    %c10 = arith.constant 10 : index
    %114 = memref.load %arg2[%c10] : memref<12xf32, #tpu.memory_space<smem>>
    %115 = vector.broadcast %114 : f32 to vector<16x128xf32>
    %116 = arith.mulf %115, %113 : vector<16x128xf32>
    %117 = arith.addf %111, %116 : vector<16x128xf32>
    %c3_87 = arith.constant 3 : index
    %c3_88 = arith.constant 3 : index
    %c0_89 = arith.constant 0 : index
    %118 = vector.load %arg13[%c3_87, %c3_88, %c0_89] : memref<5x20x128xf32, #tpu.memory_space<vmem>>, vector<1x16x128xf32>
    %119 = vector.shape_cast %118 : vector<1x16x128xf32> to vector<16x128xf32>
    %c11 = arith.constant 11 : index
    %120 = memref.load %arg2[%c11] : memref<12xf32, #tpu.memory_space<smem>>
    %121 = vector.broadcast %120 : f32 to vector<16x128xf32>
    %122 = arith.mulf %121, %119 : vector<16x128xf32>
    %123 = arith.addf %117, %122 : vector<16x128xf32>
    %c0_90 = arith.constant 0 : index
    %c0_91 = arith.constant 0 : index
    %c0_92 = arith.constant 0 : index
    %124 = vector.load %arg3[%c0_90, %c0_91, %c0_92] : memref<1x16x1xf32, #tpu.memory_space<vmem>>, vector<1x16x1xf32>
    %125 = vector.shape_cast %124 : vector<1x16x1xf32> to vector<16x1xf32>
    %126 = vector.broadcast %125 : vector<16x1xf32> to vector<16x128xf32>
    %127 = arith.addf %123, %126 : vector<16x128xf32>
    %c0_93 = arith.constant 0 : index
    %c0_94 = arith.constant 0 : index
    %c0_95 = arith.constant 0 : index
    %128 = vector.load %arg1[%c0_93, %c0_94, %c0_95] : memref<4x16x128xf32, #tpu.memory_space<vmem>>, vector<1x16x128xf32>
    %129 = vector.shape_cast %128 : vector<1x16x128xf32> to vector<16x128xf32>
    %130 = arith.addf %127, %129 : vector<16x128xf32>
    %cst_96 = arith.constant 0.000000e+00 : f32
    %131 = vector.broadcast %cst_96 : f32 to vector<16x128xf32>
    %132 = arith.maximumf %130, %131 : vector<16x128xf32>
    %c0_97 = arith.constant 0 : index
    %c0_98 = arith.constant 0 : index
    %c0_99 = arith.constant 0 : index
    %133 = vector.load %arg12[%c0_97, %c0_98, %c0_99] : memref<4x16x128xf32, #tpu.memory_space<vmem>>, vector<1x16x128xf32>
    %134 = vector.shape_cast %133 : vector<1x16x128xf32> to vector<16x128xf32>
    %135 = vector.shape_cast %132 : vector<16x128xf32> to vector<1x16x128xf32>
    tpu.vector_store %arg12[%c0_97, %c0_98, %c0_99], %135 {strides = array<i32>} : memref<4x16x128xf32, #tpu.memory_space<vmem>>, vector<1x16x128xf32>,
    %cst_100 = arith.constant 0.000000e+00 : f32
    %136 = vector.broadcast %cst_100 : f32 to vector<16x128xf32>
    %c0_101 = arith.constant 0 : index
    %c2_102 = arith.constant 2 : index
    %c0_103 = arith.constant 0 : index
    %137 = vector.load %arg13[%c0_101, %c2_102, %c0_103] : memref<5x20x128xf32, #tpu.memory_space<vmem>>, vector<1x16x128xf32>
    %138 = vector.shape_cast %137 : vector<1x16x128xf32> to vector<16x128xf32>
    %c0_104 = arith.constant 0 : index
    %139 = memref.load %arg4[%c0_104] : memref<4xf32, #tpu.memory_space<smem>>
    %140 = vector.broadcast %139 : f32 to vector<16x128xf32>
    %141 = arith.mulf %140, %138 : vector<16x128xf32>
    %142 = arith.addf %136, %141 : vector<16x128xf32>
    %c1_105 = arith.constant 1 : index
    %c2_106 = arith.constant 2 : index
    %c0_107 = arith.constant 0 : index
    %143 = vector.load %arg13[%c1_105, %c2_106, %c0_107] : memref<5x20x128xf32, #tpu.memory_space<vmem>>, vector<1x16x128xf32>
    %144 = vector.shape_cast %143 : vector<1x16x128xf32> to vector<16x128xf32>
    %c1_108 = arith.constant 1 : index
    %145 = memref.load %arg4[%c1_108] : memref<4xf32, #tpu.memory_space<smem>>
    %146 = vector.broadcast %145 : f32 to vector<16x128xf32>
    %147 = arith.mulf %146, %144 : vector<16x128xf32>
    %148 = arith.addf %142, %147 : vector<16x128xf32>
    %c2_109 = arith.constant 2 : index
    %c2_110 = arith.constant 2 : index
    %c0_111 = arith.constant 0 : index
    %149 = vector.load %arg13[%c2_109, %c2_110, %c0_111] : memref<5x20x128xf32, #tpu.memory_space<vmem>>, vector<1x16x128xf32>
    %150 = vector.shape_cast %149 : vector<1x16x128xf32> to vector<16x128xf32>
    %c2_112 = arith.constant 2 : index
    %151 = memref.load %arg4[%c2_112] : memref<4xf32, #tpu.memory_space<smem>>
    %152 = vector.broadcast %151 : f32 to vector<16x128xf32>
    %153 = arith.mulf %152, %150 : vector<16x128xf32>
    %154 = arith.addf %148, %153 : vector<16x128xf32>
    %c3_113 = arith.constant 3 : index
    %c2_114 = arith.constant 2 : index
    %c0_115 = arith.constant 0 : index
    %155 = vector.load %arg13[%c3_113, %c2_114, %c0_115] : memref<5x20x128xf32, #tpu.memory_space<vmem>>, vector<1x16x128xf32>
    %156 = vector.shape_cast %155 : vector<1x16x128xf32> to vector<16x128xf32>
    %c3_116 = arith.constant 3 : index
    %157 = memref.load %arg4[%c3_116] : memref<4xf32, #tpu.memory_space<smem>>
    %158 = vector.broadcast %157 : f32 to vector<16x128xf32>
    %159 = arith.mulf %158, %156 : vector<16x128xf32>
    %160 = arith.addf %154, %159 : vector<16x128xf32>
    %c0_117 = arith.constant 0 : index
    %c0_118 = arith.constant 0 : index
    %c0_119 = arith.constant 0 : index
    %161 = vector.load %arg5[%c0_117, %c0_118, %c0_119] : memref<1x16x1xf32, #tpu.memory_space<vmem>>, vector<1x16x1xf32>
    %162 = vector.shape_cast %161 : vector<1x16x1xf32> to vector<16x1xf32>
    %163 = vector.broadcast %162 : vector<16x1xf32> to vector<16x128xf32>
    %164 = arith.addf %160, %163 : vector<16x128xf32>
    %c1_120 = arith.constant 1 : index
    %c0_121 = arith.constant 0 : index
    %c0_122 = arith.constant 0 : index
    %165 = vector.load %arg1[%c1_120, %c0_121, %c0_122] : memref<4x16x128xf32, #tpu.memory_space<vmem>>, vector<1x16x128xf32>
    %166 = vector.shape_cast %165 : vector<1x16x128xf32> to vector<16x128xf32>
    %167 = arith.addf %164, %166 : vector<16x128xf32>
    %cst_123 = arith.constant 0.000000e+00 : f32
    %168 = vector.broadcast %cst_123 : f32 to vector<16x128xf32>
    %169 = arith.maximumf %167, %168 : vector<16x128xf32>
    %c1_124 = arith.constant 1 : index
    %c0_125 = arith.constant 0 : index
    %c0_126 = arith.constant 0 : index
    %170 = vector.load %arg12[%c1_124, %c0_125, %c0_126] : memref<4x16x128xf32, #tpu.memory_space<vmem>>, vector<1x16x128xf32>
    %171 = vector.shape_cast %170 : vector<1x16x128xf32> to vector<16x128xf32>
    %172 = vector.shape_cast %169 : vector<16x128xf32> to vector<1x16x128xf32>
    tpu.vector_store %arg12[%c1_124, %c0_125, %c0_126], %172 {strides = array<i32>} : memref<4x16x128xf32, #tpu.memory_space<vmem>>, vector<1x16x128xf32>,
    %cst_127 = arith.constant 0.000000e+00 : f32
    %173 = vector.broadcast %cst_127 : f32 to vector<16x128xf32>
    %c0_128 = arith.constant 0 : index
    %c0_129 = arith.constant 0 : index
    %c0_130 = arith.constant 0 : index
    %174 = vector.load %arg13[%c0_128, %c0_129, %c0_130] : memref<5x20x128xf32, #tpu.memory_space<vmem>>, vector<1x16x128xf32>
    %175 = vector.shape_cast %174 : vector<1x16x128xf32> to vector<16x128xf32>
    %c0_131 = arith.constant 0 : index
    %176 = memref.load %arg6[%c0_131] : memref<20xf32, #tpu.memory_space<smem>>
    %177 = vector.broadcast %176 : f32 to vector<16x128xf32>
    %178 = arith.mulf %177, %175 : vector<16x128xf32>
    %179 = arith.addf %173, %178 : vector<16x128xf32>
    %c0_132 = arith.constant 0 : index
    %c1_133 = arith.constant 1 : index
    %c0_134 = arith.constant 0 : index
    %180 = vector.load %arg13[%c0_132, %c1_133, %c0_134] : memref<5x20x128xf32, #tpu.memory_space<vmem>>, vector<1x16x128xf32>
    %181 = vector.shape_cast %180 : vector<1x16x128xf32> to vector<16x128xf32>
    %c1_135 = arith.constant 1 : index
    %182 = memref.load %arg6[%c1_135] : memref<20xf32, #tpu.memory_space<smem>>
    %183 = vector.broadcast %182 : f32 to vector<16x128xf32>
    %184 = arith.mulf %183, %181 : vector<16x128xf32>
    %185 = arith.addf %179, %184 : vector<16x128xf32>
    %c0_136 = arith.constant 0 : index
    %c2_137 = arith.constant 2 : index
    %c0_138 = arith.constant 0 : index
    %186 = vector.load %arg13[%c0_136, %c2_137, %c0_138] : memref<5x20x128xf32, #tpu.memory_space<vmem>>, vector<1x16x128xf32>
    %187 = vector.shape_cast %186 : vector<1x16x128xf32> to vector<16x128xf32>
    %c2_139 = arith.constant 2 : index
    %188 = memref.load %arg6[%c2_139] : memref<20xf32, #tpu.memory_space<smem>>
    %189 = vector.broadcast %188 : f32 to vector<16x128xf32>
    %190 = arith.mulf %189, %187 : vector<16x128xf32>
    %191 = arith.addf %185, %190 : vector<16x128xf32>
    %c0_140 = arith.constant 0 : index
    %c3_141 = arith.constant 3 : index
    %c0_142 = arith.constant 0 : index
    %192 = vector.load %arg13[%c0_140, %c3_141, %c0_142] : memref<5x20x128xf32, #tpu.memory_space<vmem>>, vector<1x16x128xf32>
    %193 = vector.shape_cast %192 : vector<1x16x128xf32> to vector<16x128xf32>
    %c3_143 = arith.constant 3 : index
    %194 = memref.load %arg6[%c3_143] : memref<20xf32, #tpu.memory_space<smem>>
    %195 = vector.broadcast %194 : f32 to vector<16x128xf32>
    %196 = arith.mulf %195, %193 : vector<16x128xf32>
    %197 = arith.addf %191, %196 : vector<16x128xf32>
    %c0_144 = arith.constant 0 : index
    %c4_145 = arith.constant 4 : index
    %c0_146 = arith.constant 0 : index
    %198 = vector.load %arg13[%c0_144, %c4_145, %c0_146] : memref<5x20x128xf32, #tpu.memory_space<vmem>>, vector<1x16x128xf32>
    %199 = vector.shape_cast %198 : vector<1x16x128xf32> to vector<16x128xf32>
    %c4_147 = arith.constant 4 : index
    %200 = memref.load %arg6[%c4_147] : memref<20xf32, #tpu.memory_space<smem>>
    %201 = vector.broadcast %200 : f32 to vector<16x128xf32>
    %202 = arith.mulf %201, %199 : vector<16x128xf32>
    %203 = arith.addf %197, %202 : vector<16x128xf32>
    %c1_148 = arith.constant 1 : index
    %c0_149 = arith.constant 0 : index
    %c0_150 = arith.constant 0 : index
    %204 = vector.load %arg13[%c1_148, %c0_149, %c0_150] : memref<5x20x128xf32, #tpu.memory_space<vmem>>, vector<1x16x128xf32>
    %205 = vector.shape_cast %204 : vector<1x16x128xf32> to vector<16x128xf32>
    %c5_151 = arith.constant 5 : index
    %206 = memref.load %arg6[%c5_151] : memref<20xf32, #tpu.memory_space<smem>>
    %207 = vector.broadcast %206 : f32 to vector<16x128xf32>
    %208 = arith.mulf %207, %205 : vector<16x128xf32>
    %209 = arith.addf %203, %208 : vector<16x128xf32>
    %c1_152 = arith.constant 1 : index
    %c1_153 = arith.constant 1 : index
    %c0_154 = arith.constant 0 : index
    %210 = vector.load %arg13[%c1_152, %c1_153, %c0_154] : memref<5x20x128xf32, #tpu.memory_space<vmem>>, vector<1x16x128xf32>
    %211 = vector.shape_cast %210 : vector<1x16x128xf32> to vector<16x128xf32>
    %c6_155 = arith.constant 6 : index
    %212 = memref.load %arg6[%c6_155] : memref<20xf32, #tpu.memory_space<smem>>
    %213 = vector.broadcast %212 : f32 to vector<16x128xf32>
    %214 = arith.mulf %213, %211 : vector<16x128xf32>
    %215 = arith.addf %209, %214 : vector<16x128xf32>
    %c1_156 = arith.constant 1 : index
    %c2_157 = arith.constant 2 : index
    %c0_158 = arith.constant 0 : index
    %216 = vector.load %arg13[%c1_156, %c2_157, %c0_158] : memref<5x20x128xf32, #tpu.memory_space<vmem>>, vector<1x16x128xf32>
    %217 = vector.shape_cast %216 : vector<1x16x128xf32> to vector<16x128xf32>
    %c7_159 = arith.constant 7 : index
    %218 = memref.load %arg6[%c7_159] : memref<20xf32, #tpu.memory_space<smem>>
    %219 = vector.broadcast %218 : f32 to vector<16x128xf32>
    %220 = arith.mulf %219, %217 : vector<16x128xf32>
    %221 = arith.addf %215, %220 : vector<16x128xf32>
    %c1_160 = arith.constant 1 : index
    %c3_161 = arith.constant 3 : index
    %c0_162 = arith.constant 0 : index
    %222 = vector.load %arg13[%c1_160, %c3_161, %c0_162] : memref<5x20x128xf32, #tpu.memory_space<vmem>>, vector<1x16x128xf32>
    %223 = vector.shape_cast %222 : vector<1x16x128xf32> to vector<16x128xf32>
    %c8_163 = arith.constant 8 : index
    %224 = memref.load %arg6[%c8_163] : memref<20xf32, #tpu.memory_space<smem>>
    %225 = vector.broadcast %224 : f32 to vector<16x128xf32>
    %226 = arith.mulf %225, %223 : vector<16x128xf32>
    %227 = arith.addf %221, %226 : vector<16x128xf32>
    %c1_164 = arith.constant 1 : index
    %c4_165 = arith.constant 4 : index
    %c0_166 = arith.constant 0 : index
    %228 = vector.load %arg13[%c1_164, %c4_165, %c0_166] : memref<5x20x128xf32, #tpu.memory_space<vmem>>, vector<1x16x128xf32>
    %229 = vector.shape_cast %228 : vector<1x16x128xf32> to vector<16x128xf32>
    %c9_167 = arith.constant 9 : index
    %230 = memref.load %arg6[%c9_167] : memref<20xf32, #tpu.memory_space<smem>>
    %231 = vector.broadcast %230 : f32 to vector<16x128xf32>
    %232 = arith.mulf %231, %229 : vector<16x128xf32>
    %233 = arith.addf %227, %232 : vector<16x128xf32>
    %c2_168 = arith.constant 2 : index
    %c0_169 = arith.constant 0 : index
    %c0_170 = arith.constant 0 : index
    %234 = vector.load %arg13[%c2_168, %c0_169, %c0_170] : memref<5x20x128xf32, #tpu.memory_space<vmem>>, vector<1x16x128xf32>
    %235 = vector.shape_cast %234 : vector<1x16x128xf32> to vector<16x128xf32>
    %c10_171 = arith.constant 10 : index
    %236 = memref.load %arg6[%c10_171] : memref<20xf32, #tpu.memory_space<smem>>
    %237 = vector.broadcast %236 : f32 to vector<16x128xf32>
    %238 = arith.mulf %237, %235 : vector<16x128xf32>
    %239 = arith.addf %233, %238 : vector<16x128xf32>
    %c2_172 = arith.constant 2 : index
    %c1_173 = arith.constant 1 : index
    %c0_174 = arith.constant 0 : index
    %240 = vector.load %arg13[%c2_172, %c1_173, %c0_174] : memref<5x20x128xf32, #tpu.memory_space<vmem>>, vector<1x16x128xf32>
    %241 = vector.shape_cast %240 : vector<1x16x128xf32> to vector<16x128xf32>
    %c11_175 = arith.constant 11 : index
    %242 = memref.load %arg6[%c11_175] : memref<20xf32, #tpu.memory_space<smem>>
    %243 = vector.broadcast %242 : f32 to vector<16x128xf32>
    %244 = arith.mulf %243, %241 : vector<16x128xf32>
    %245 = arith.addf %239, %244 : vector<16x128xf32>
    %c2_176 = arith.constant 2 : index
    %c2_177 = arith.constant 2 : index
    %c0_178 = arith.constant 0 : index
    %246 = vector.load %arg13[%c2_176, %c2_177, %c0_178] : memref<5x20x128xf32, #tpu.memory_space<vmem>>, vector<1x16x128xf32>
    %247 = vector.shape_cast %246 : vector<1x16x128xf32> to vector<16x128xf32>
    %c12 = arith.constant 12 : index
    %248 = memref.load %arg6[%c12] : memref<20xf32, #tpu.memory_space<smem>>
    %249 = vector.broadcast %248 : f32 to vector<16x128xf32>
    %250 = arith.mulf %249, %247 : vector<16x128xf32>
    %251 = arith.addf %245, %250 : vector<16x128xf32>
    %c2_179 = arith.constant 2 : index
    %c3_180 = arith.constant 3 : index
    %c0_181 = arith.constant 0 : index
    %252 = vector.load %arg13[%c2_179, %c3_180, %c0_181] : memref<5x20x128xf32, #tpu.memory_space<vmem>>, vector<1x16x128xf32>
    %253 = vector.shape_cast %252 : vector<1x16x128xf32> to vector<16x128xf32>
    %c13 = arith.constant 13 : index
    %254 = memref.load %arg6[%c13] : memref<20xf32, #tpu.memory_space<smem>>
    %255 = vector.broadcast %254 : f32 to vector<16x128xf32>
    %256 = arith.mulf %255, %253 : vector<16x128xf32>
    %257 = arith.addf %251, %256 : vector<16x128xf32>
    %c2_182 = arith.constant 2 : index
    %c4_183 = arith.constant 4 : index
    %c0_184 = arith.constant 0 : index
    %258 = vector.load %arg13[%c2_182, %c4_183, %c0_184] : memref<5x20x128xf32, #tpu.memory_space<vmem>>, vector<1x16x128xf32>
    %259 = vector.shape_cast %258 : vector<1x16x128xf32> to vector<16x128xf32>
    %c14 = arith.constant 14 : index
    %260 = memref.load %arg6[%c14] : memref<20xf32, #tpu.memory_space<smem>>
    %261 = vector.broadcast %260 : f32 to vector<16x128xf32>
    %262 = arith.mulf %261, %259 : vector<16x128xf32>
    %263 = arith.addf %257, %262 : vector<16x128xf32>
    %c3_185 = arith.constant 3 : index
    %c0_186 = arith.constant 0 : index
    %c0_187 = arith.constant 0 : index
    %264 = vector.load %arg13[%c3_185, %c0_186, %c0_187] : memref<5x20x128xf32, #tpu.memory_space<vmem>>, vector<1x16x128xf32>
    %265 = vector.shape_cast %264 : vector<1x16x128xf32> to vector<16x128xf32>
    %c15 = arith.constant 15 : index
    %266 = memref.load %arg6[%c15] : memref<20xf32, #tpu.memory_space<smem>>
    %267 = vector.broadcast %266 : f32 to vector<16x128xf32>
    %268 = arith.mulf %267, %265 : vector<16x128xf32>
    %269 = arith.addf %263, %268 : vector<16x128xf32>
    %c3_188 = arith.constant 3 : index
    %c1_189 = arith.constant 1 : index
    %c0_190 = arith.constant 0 : index
    %270 = vector.load %arg13[%c3_188, %c1_189, %c0_190] : memref<5x20x128xf32, #tpu.memory_space<vmem>>, vector<1x16x128xf32>
    %271 = vector.shape_cast %270 : vector<1x16x128xf32> to vector<16x128xf32>
    %c16 = arith.constant 16 : index
    %272 = memref.load %arg6[%c16] : memref<20xf32, #tpu.memory_space<smem>>
    %273 = vector.broadcast %272 : f32 to vector<16x128xf32>
    %274 = arith.mulf %273, %271 : vector<16x128xf32>
    %275 = arith.addf %269, %274 : vector<16x128xf32>
    %c3_191 = arith.constant 3 : index
    %c2_192 = arith.constant 2 : index
    %c0_193 = arith.constant 0 : index
    %276 = vector.load %arg13[%c3_191, %c2_192, %c0_193] : memref<5x20x128xf32, #tpu.memory_space<vmem>>, vector<1x16x128xf32>
    %277 = vector.shape_cast %276 : vector<1x16x128xf32> to vector<16x128xf32>
    %c17 = arith.constant 17 : index
    %278 = memref.load %arg6[%c17] : memref<20xf32, #tpu.memory_space<smem>>
    %279 = vector.broadcast %278 : f32 to vector<16x128xf32>
    %280 = arith.mulf %279, %277 : vector<16x128xf32>
    %281 = arith.addf %275, %280 : vector<16x128xf32>
    %c3_194 = arith.constant 3 : index
    %c3_195 = arith.constant 3 : index
    %c0_196 = arith.constant 0 : index
    %282 = vector.load %arg13[%c3_194, %c3_195, %c0_196] : memref<5x20x128xf32, #tpu.memory_space<vmem>>, vector<1x16x128xf32>
    %283 = vector.shape_cast %282 : vector<1x16x128xf32> to vector<16x128xf32>
    %c18_197 = arith.constant 18 : index
    %284 = memref.load %arg6[%c18_197] : memref<20xf32, #tpu.memory_space<smem>>
    %285 = vector.broadcast %284 : f32 to vector<16x128xf32>
    %286 = arith.mulf %285, %283 : vector<16x128xf32>
    %287 = arith.addf %281, %286 : vector<16x128xf32>
    %c3_198 = arith.constant 3 : index
    %c4_199 = arith.constant 4 : index
    %c0_200 = arith.constant 0 : index
    %288 = vector.load %arg13[%c3_198, %c4_199, %c0_200] : memref<5x20x128xf32, #tpu.memory_space<vmem>>, vector<1x16x128xf32>
    %289 = vector.shape_cast %288 : vector<1x16x128xf32> to vector<16x128xf32>
    %c19 = arith.constant 19 : index
    %290 = memref.load %arg6[%c19] : memref<20xf32, #tpu.memory_space<smem>>
    %291 = vector.broadcast %290 : f32 to vector<16x128xf32>
    %292 = arith.mulf %291, %289 : vector<16x128xf32>
    %293 = arith.addf %287, %292 : vector<16x128xf32>
    %c0_201 = arith.constant 0 : index
    %c0_202 = arith.constant 0 : index
    %c0_203 = arith.constant 0 : index
    %294 = vector.load %arg7[%c0_201, %c0_202, %c0_203] : memref<1x16x1xf32, #tpu.memory_space<vmem>>, vector<1x16x1xf32>
    %295 = vector.shape_cast %294 : vector<1x16x1xf32> to vector<16x1xf32>
    %296 = vector.broadcast %295 : vector<16x1xf32> to vector<16x128xf32>
    %297 = arith.addf %293, %296 : vector<16x128xf32>
    %c2_204 = arith.constant 2 : index
    %c0_205 = arith.constant 0 : index
    %c0_206 = arith.constant 0 : index
    %298 = vector.load %arg1[%c2_204, %c0_205, %c0_206] : memref<4x16x128xf32, #tpu.memory_space<vmem>>, vector<1x16x128xf32>
    %299 = vector.shape_cast %298 : vector<1x16x128xf32> to vector<16x128xf32>
    %300 = arith.addf %297, %299 : vector<16x128xf32>
    %cst_207 = arith.constant 0.000000e+00 : f32
    %301 = vector.broadcast %cst_207 : f32 to vector<16x128xf32>
    %302 = arith.maximumf %300, %301 : vector<16x128xf32>
    %c2_208 = arith.constant 2 : index
    %c0_209 = arith.constant 0 : index
    %c0_210 = arith.constant 0 : index
    %303 = vector.load %arg12[%c2_208, %c0_209, %c0_210] : memref<4x16x128xf32, #tpu.memory_space<vmem>>, vector<1x16x128xf32>
    %304 = vector.shape_cast %303 : vector<1x16x128xf32> to vector<16x128xf32>
    %305 = vector.shape_cast %302 : vector<16x128xf32> to vector<1x16x128xf32>
    tpu.vector_store %arg12[%c2_208, %c0_209, %c0_210], %305 {strides = array<i32>} : memref<4x16x128xf32, #tpu.memory_space<vmem>>, vector<1x16x128xf32>,
    %cst_211 = arith.constant 0.000000e+00 : f32
    %306 = vector.broadcast %cst_211 : f32 to vector<16x128xf32>
    %c0_212 = arith.constant 0 : index
    %c1_213 = arith.constant 1 : index
    %c0_214 = arith.constant 0 : index
    %307 = vector.load %arg13[%c0_212, %c1_213, %c0_214] : memref<5x20x128xf32, #tpu.memory_space<vmem>>, vector<1x16x128xf32>
    %308 = vector.shape_cast %307 : vector<1x16x128xf32> to vector<16x128xf32>
    %c0_215 = arith.constant 0 : index
    %309 = memref.load %arg8[%c0_215] : memref<12xf32, #tpu.memory_space<smem>>
    %310 = vector.broadcast %309 : f32 to vector<16x128xf32>
    %311 = arith.mulf %310, %308 : vector<16x128xf32>
    %312 = arith.addf %306, %311 : vector<16x128xf32>
    %c0_216 = arith.constant 0 : index
    %c2_217 = arith.constant 2 : index
    %c0_218 = arith.constant 0 : index
    %313 = vector.load %arg13[%c0_216, %c2_217, %c0_218] : memref<5x20x128xf32, #tpu.memory_space<vmem>>, vector<1x16x128xf32>
    %314 = vector.shape_cast %313 : vector<1x16x128xf32> to vector<16x128xf32>
    %c1_219 = arith.constant 1 : index
    %315 = memref.load %arg8[%c1_219] : memref<12xf32, #tpu.memory_space<smem>>
    %316 = vector.broadcast %315 : f32 to vector<16x128xf32>
    %317 = arith.mulf %316, %314 : vector<16x128xf32>
    %318 = arith.addf %312, %317 : vector<16x128xf32>
    %c0_220 = arith.constant 0 : index
    %c3_221 = arith.constant 3 : index
    %c0_222 = arith.constant 0 : index
    %319 = vector.load %arg13[%c0_220, %c3_221, %c0_222] : memref<5x20x128xf32, #tpu.memory_space<vmem>>, vector<1x16x128xf32>
    %320 = vector.shape_cast %319 : vector<1x16x128xf32> to vector<16x128xf32>
    %c2_223 = arith.constant 2 : index
    %321 = memref.load %arg8[%c2_223] : memref<12xf32, #tpu.memory_space<smem>>
    %322 = vector.broadcast %321 : f32 to vector<16x128xf32>
    %323 = arith.mulf %322, %320 : vector<16x128xf32>
    %324 = arith.addf %318, %323 : vector<16x128xf32>
    %c1_224 = arith.constant 1 : index
    %c1_225 = arith.constant 1 : index
    %c0_226 = arith.constant 0 : index
    %325 = vector.load %arg13[%c1_224, %c1_225, %c0_226] : memref<5x20x128xf32, #tpu.memory_space<vmem>>, vector<1x16x128xf32>
    %326 = vector.shape_cast %325 : vector<1x16x128xf32> to vector<16x128xf32>
    %c3_227 = arith.constant 3 : index
    %327 = memref.load %arg8[%c3_227] : memref<12xf32, #tpu.memory_space<smem>>
    %328 = vector.broadcast %327 : f32 to vector<16x128xf32>
    %329 = arith.mulf %328, %326 : vector<16x128xf32>
    %330 = arith.addf %324, %329 : vector<16x128xf32>
    %c1_228 = arith.constant 1 : index
    %c2_229 = arith.constant 2 : index
    %c0_230 = arith.constant 0 : index
    %331 = vector.load %arg13[%c1_228, %c2_229, %c0_230] : memref<5x20x128xf32, #tpu.memory_space<vmem>>, vector<1x16x128xf32>
    %332 = vector.shape_cast %331 : vector<1x16x128xf32> to vector<16x128xf32>
    %c4_231 = arith.constant 4 : index
    %333 = memref.load %arg8[%c4_231] : memref<12xf32, #tpu.memory_space<smem>>
    %334 = vector.broadcast %333 : f32 to vector<16x128xf32>
    %335 = arith.mulf %334, %332 : vector<16x128xf32>
    %336 = arith.addf %330, %335 : vector<16x128xf32>
    %c1_232 = arith.constant 1 : index
    %c3_233 = arith.constant 3 : index
    %c0_234 = arith.constant 0 : index
    %337 = vector.load %arg13[%c1_232, %c3_233, %c0_234] : memref<5x20x128xf32, #tpu.memory_space<vmem>>, vector<1x16x128xf32>
    %338 = vector.shape_cast %337 : vector<1x16x128xf32> to vector<16x128xf32>
    %c5_235 = arith.constant 5 : index
    %339 = memref.load %arg8[%c5_235] : memref<12xf32, #tpu.memory_space<smem>>
    %340 = vector.broadcast %339 : f32 to vector<16x128xf32>
    %341 = arith.mulf %340, %338 : vector<16x128xf32>
    %342 = arith.addf %336, %341 : vector<16x128xf32>
    %c2_236 = arith.constant 2 : index
    %c1_237 = arith.constant 1 : index
    %c0_238 = arith.constant 0 : index
    %343 = vector.load %arg13[%c2_236, %c1_237, %c0_238] : memref<5x20x128xf32, #tpu.memory_space<vmem>>, vector<1x16x128xf32>
    %344 = vector.shape_cast %343 : vector<1x16x128xf32> to vector<16x128xf32>
    %c6_239 = arith.constant 6 : index
    %345 = memref.load %arg8[%c6_239] : memref<12xf32, #tpu.memory_space<smem>>
    %346 = vector.broadcast %345 : f32 to vector<16x128xf32>
    %347 = arith.mulf %346, %344 : vector<16x128xf32>
    %348 = arith.addf %342, %347 : vector<16x128xf32>
    %c2_240 = arith.constant 2 : index
    %c2_241 = arith.constant 2 : index
    %c0_242 = arith.constant 0 : index
    %349 = vector.load %arg13[%c2_240, %c2_241, %c0_242] : memref<5x20x128xf32, #tpu.memory_space<vmem>>, vector<1x16x128xf32>
    %350 = vector.shape_cast %349 : vector<1x16x128xf32> to vector<16x128xf32>
    %c7_243 = arith.constant 7 : index
    %351 = memref.load %arg8[%c7_243] : memref<12xf32, #tpu.memory_space<smem>>
    %352 = vector.broadcast %351 : f32 to vector<16x128xf32>
    %353 = arith.mulf %352, %350 : vector<16x128xf32>
    %354 = arith.addf %348, %353 : vector<16x128xf32>
    %c2_244 = arith.constant 2 : index
    %c3_245 = arith.constant 3 : index
    %c0_246 = arith.constant 0 : index
    %355 = vector.load %arg13[%c2_244, %c3_245, %c0_246] : memref<5x20x128xf32, #tpu.memory_space<vmem>>, vector<1x16x128xf32>
    %356 = vector.shape_cast %355 : vector<1x16x128xf32> to vector<16x128xf32>
    %c8_247 = arith.constant 8 : index
    %357 = memref.load %arg8[%c8_247] : memref<12xf32, #tpu.memory_space<smem>>
    %358 = vector.broadcast %357 : f32 to vector<16x128xf32>
    %359 = arith.mulf %358, %356 : vector<16x128xf32>
    %360 = arith.addf %354, %359 : vector<16x128xf32>
    %c3_248 = arith.constant 3 : index
    %c1_249 = arith.constant 1 : index
    %c0_250 = arith.constant 0 : index
    %361 = vector.load %arg13[%c3_248, %c1_249, %c0_250] : memref<5x20x128xf32, #tpu.memory_space<vmem>>, vector<1x16x128xf32>
    %362 = vector.shape_cast %361 : vector<1x16x128xf32> to vector<16x128xf32>
    %c9_251 = arith.constant 9 : index
    %363 = memref.load %arg8[%c9_251] : memref<12xf32, #tpu.memory_space<smem>>
    %364 = vector.broadcast %363 : f32 to vector<16x128xf32>
    %365 = arith.mulf %364, %362 : vector<16x128xf32>
    %366 = arith.addf %360, %365 : vector<16x128xf32>
    %c3_252 = arith.constant 3 : index
    %c2_253 = arith.constant 2 : index
    %c0_254 = arith.constant 0 : index
    %367 = vector.load %arg13[%c3_252, %c2_253, %c0_254] : memref<5x20x128xf32, #tpu.memory_space<vmem>>, vector<1x16x128xf32>
    %368 = vector.shape_cast %367 : vector<1x16x128xf32> to vector<16x128xf32>
    %c10_255 = arith.constant 10 : index
    %369 = memref.load %arg8[%c10_255] : memref<12xf32, #tpu.memory_space<smem>>
    %370 = vector.broadcast %369 : f32 to vector<16x128xf32>
    %371 = arith.mulf %370, %368 : vector<16x128xf32>
    %372 = arith.addf %366, %371 : vector<16x128xf32>
    %c3_256 = arith.constant 3 : index
    %c3_257 = arith.constant 3 : index
    %c0_258 = arith.constant 0 : index
    %373 = vector.load %arg13[%c3_256, %c3_257, %c0_258] : memref<5x20x128xf32, #tpu.memory_space<vmem>>, vector<1x16x128xf32>
    %374 = vector.shape_cast %373 : vector<1x16x128xf32> to vector<16x128xf32>
    %c11_259 = arith.constant 11 : index
    %375 = memref.load %arg8[%c11_259] : memref<12xf32, #tpu.memory_space<smem>>
    %376 = vector.broadcast %375 : f32 to vector<16x128xf32>
    %377 = arith.mulf %376, %374 : vector<16x128xf32>
    %378 = arith.addf %372, %377 : vector<16x128xf32>
    %c0_260 = arith.constant 0 : index
    %c0_261 = arith.constant 0 : index
    %c0_262 = arith.constant 0 : index
    %379 = vector.load %arg9[%c0_260, %c0_261, %c0_262] : memref<1x16x1xf32, #tpu.memory_space<vmem>>, vector<1x16x1xf32>
    %380 = vector.shape_cast %379 : vector<1x16x1xf32> to vector<16x1xf32>
    %381 = vector.broadcast %380 : vector<16x1xf32> to vector<16x128xf32>
    %382 = arith.addf %378, %381 : vector<16x128xf32>
    %c4_263 = arith.constant 4 : index
    %c2_264 = arith.constant 2 : index
    %c0_265 = arith.constant 0 : index
    %383 = vector.load %arg13[%c4_263, %c2_264, %c0_265] : memref<5x20x128xf32, #tpu.memory_space<vmem>>, vector<1x16x128xf32>
    %384 = vector.shape_cast %383 : vector<1x16x128xf32> to vector<16x128xf32>
    %385 = vector.shape_cast %382 : vector<16x128xf32> to vector<1x16x128xf32>
    tpu.vector_store %arg13[%c4_263, %c2_264, %c0_265], %385 {strides = array<i32>} : memref<5x20x128xf32, #tpu.memory_space<vmem>>, vector<1x16x128xf32>,
    %cst_266 = arith.constant 0.000000e+00 : f32
    %386 = vector.broadcast %cst_266 : f32 to vector<16x128xf32>
    %c4_267 = arith.constant 4 : index
    %c1_268 = arith.constant 1 : index
    %c0_269 = arith.constant 0 : index
    %387 = vector.load %arg13[%c4_267, %c1_268, %c0_269] : memref<5x20x128xf32, #tpu.memory_space<vmem>>, vector<1x16x128xf32>
    %388 = vector.shape_cast %387 : vector<1x16x128xf32> to vector<16x128xf32>
    %c0_270 = arith.constant 0 : index
    %389 = memref.load %arg10[%c0_270] : memref<3xf32, #tpu.memory_space<smem>>
    %390 = vector.broadcast %389 : f32 to vector<16x128xf32>
    %391 = arith.mulf %390, %388 : vector<16x128xf32>
    %392 = arith.addf %386, %391 : vector<16x128xf32>
    %c4_271 = arith.constant 4 : index
    %c2_272 = arith.constant 2 : index
    %c0_273 = arith.constant 0 : index
    %393 = vector.load %arg13[%c4_271, %c2_272, %c0_273] : memref<5x20x128xf32, #tpu.memory_space<vmem>>, vector<1x16x128xf32>
    %394 = vector.shape_cast %393 : vector<1x16x128xf32> to vector<16x128xf32>
    %c1_274 = arith.constant 1 : index
    %395 = memref.load %arg10[%c1_274] : memref<3xf32, #tpu.memory_space<smem>>
    %396 = vector.broadcast %395 : f32 to vector<16x128xf32>
    %397 = arith.mulf %396, %394 : vector<16x128xf32>
    %398 = arith.addf %392, %397 : vector<16x128xf32>
    %c4_275 = arith.constant 4 : index
    %c3_276 = arith.constant 3 : index
    %c0_277 = arith.constant 0 : index
    %399 = vector.load %arg13[%c4_275, %c3_276, %c0_277] : memref<5x20x128xf32, #tpu.memory_space<vmem>>, vector<1x16x128xf32>
    %400 = vector.shape_cast %399 : vector<1x16x128xf32> to vector<16x128xf32>
    %c2_278 = arith.constant 2 : index
    %401 = memref.load %arg10[%c2_278] : memref<3xf32, #tpu.memory_space<smem>>
    %402 = vector.broadcast %401 : f32 to vector<16x128xf32>
    %403 = arith.mulf %402, %400 : vector<16x128xf32>
    %404 = arith.addf %398, %403 : vector<16x128xf32>
    %c0_279 = arith.constant 0 : index
    %c0_280 = arith.constant 0 : index
    %c0_281 = arith.constant 0 : index
    %405 = vector.load %arg11[%c0_279, %c0_280, %c0_281] : memref<1x16x1xf32, #tpu.memory_space<vmem>>, vector<1x16x1xf32>
    %406 = vector.shape_cast %405 : vector<1x16x1xf32> to vector<16x1xf32>
    %407 = vector.broadcast %406 : vector<16x1xf32> to vector<16x128xf32>
    %408 = arith.addf %404, %407 : vector<16x128xf32>
    %c3_282 = arith.constant 3 : index
    %c0_283 = arith.constant 0 : index
    %c0_284 = arith.constant 0 : index
    %409 = vector.load %arg1[%c3_282, %c0_283, %c0_284] : memref<4x16x128xf32, #tpu.memory_space<vmem>>, vector<1x16x128xf32>
    %410 = vector.shape_cast %409 : vector<1x16x128xf32> to vector<16x128xf32>
    %411 = arith.addf %408, %410 : vector<16x128xf32>
    %cst_285 = arith.constant 0.000000e+00 : f32
    %412 = vector.broadcast %cst_285 : f32 to vector<16x128xf32>
    %413 = arith.maximumf %411, %412 : vector<16x128xf32>
    %c3_286 = arith.constant 3 : index
    %c0_287 = arith.constant 0 : index
    %c0_288 = arith.constant 0 : index
    %414 = vector.load %arg12[%c3_286, %c0_287, %c0_288] : memref<4x16x128xf32, #tpu.memory_space<vmem>>, vector<1x16x128xf32>
    %415 = vector.shape_cast %414 : vector<1x16x128xf32> to vector<16x128xf32>
    %416 = vector.shape_cast %413 : vector<16x128xf32> to vector<1x16x128xf32>
    tpu.vector_store %arg12[%c3_286, %c0_287, %c0_288], %416 {strides = array<i32>} : memref<4x16x128xf32, #tpu.memory_space<vmem>>, vector<1x16x128xf32>,
    return
  }
  func.func @transform_0(%arg0: i32) -> (i32, i32, i32) {
    %c0_i32 = arith.constant 0 : i32
    %c0_i32_0 = arith.constant 0 : i32
    %c0_i32_1 = arith.constant 0 : i32
    return %c0_i32, %c0_i32_0, %arg0 : i32, i32, i32
  }
  func.func @transform_1(%arg0: i32) -> i32 {
    %c0_i32 = arith.constant 0 : i32
    %c0_i32_0 = arith.constant 0 : i32
    return %c0_i32 : i32
  }
  func.func @transform_2(%arg0: i32) -> (i32, i32, i32) {
    %c0_i32 = arith.constant 0 : i32
    %c0_i32_0 = arith.constant 0 : i32
    %c0_i32_1 = arith.constant 0 : i32
    %c0_i32_2 = arith.constant 0 : i32
    return %c0_i32, %c0_i32_0, %c0_i32_1 : i32, i32, i32
  }
  func.func @transform_3(%arg0: i32) -> i32 {
    %c0_i32 = arith.constant 0 : i32
    %c0_i32_0 = arith.constant 0 : i32
    return %c0_i32 : i32
  }
  func.func @transform_4(%arg0: i32) -> (i32, i32, i32) {
    %c0_i32 = arith.constant 0 : i32
    %c0_i32_0 = arith.constant 0 : i32
    %c0_i32_1 = arith.constant 0 : i32
    %c0_i32_2 = arith.constant 0 : i32
    return %c0_i32, %c0_i32_0, %c0_i32_1 : i32, i32, i32
  }
  func.func @transform_5(%arg0: i32) -> i32 {
    %c0_i32 = arith.constant 0 : i32
    %c0_i32_0 = arith.constant 0 : i32
    return %c0_i32 : i32
  }
  func.func @transform_6(%arg0: i32) -> (i32, i32, i32) {
    %c0_i32 = arith.constant 0 : i32
    %c0_i32_0 = arith.constant 0 : i32
    %c0_i32_1 = arith.constant 0 : i32
    %c0_i32_2 = arith.constant 0 : i32
    return %c0_i32, %c0_i32_0, %c0_i32_1 : i32, i32, i32
  }
  func.func @transform_7(%arg0: i32) -> i32 {
    %c0_i32 = arith.constant 0 : i32
    %c0_i32_0 = arith.constant 0 : i32
    return %c0_i32 : i32
  }
  func.func @transform_8(%arg0: i32) -> (i32, i32, i32) {
    %c0_i32 = arith.constant 0 : i32
    %c0_i32_0 = arith.constant 0 : i32
    %c0_i32_1 = arith.constant 0 : i32
    %c0_i32_2 = arith.constant 0 : i32
    return %c0_i32, %c0_i32_0, %c0_i32_1 : i32, i32, i32
  }
  func.func @transform_9(%arg0: i32) -> i32 {
    %c0_i32 = arith.constant 0 : i32
    %c0_i32_0 = arith.constant 0 : i32
    return %c0_i32 : i32
  }
  func.func @transform_10(%arg0: i32) -> (i32, i32, i32) {
    %c0_i32 = arith.constant 0 : i32
    %c0_i32_0 = arith.constant 0 : i32
    %c0_i32_1 = arith.constant 0 : i32
    %c0_i32_2 = arith.constant 0 : i32
    return %c0_i32, %c0_i32_0, %c0_i32_1 : i32, i32, i32
  }
  func.func @transform_11(%arg0: i32) -> (i32, i32, i32) {
    %c0_i32 = arith.constant 0 : i32
    %c0_i32_0 = arith.constant 0 : i32
    %c0_i32_1 = arith.constant 0 : i32
    return %c0_i32, %c0_i32_0, %arg0 : i32, i32, i32
  }
}

</mosaic_0001>

<llo_original>
// kernel: tpu_custom_call.1
$region0: #{tpu_custom_call.1}
  #allocation0 [shape = 'u32[]', space=smem, size = 0x4, offset = 0x4, fixed_abs, tag = 'smem constant byte address 0x4 - core index']
  #allocation1 [shape = 'u32[144,128]{1,0:T(1,128)}', space=vmem, size = 0x12000, scoped, tag = 'internal scratch']
  #allocation2 [shape = 'f32[5,20,128]{2,1,0:T(8,128)}', space=vmem, size = 0xf000, scoped, tag = 'scratch operand']
  %s0 = inlined_call_operand.vmem [shape: f32[4,16,128], index: 0, kind: input, shape index: {}]
  %s1 = inlined_call_operand.vmem [shape: f32[12], index: 1, kind: input, shape index: {}]
  %s2 = inlined_call_operand.vmem [shape: f32[1,16,1], index: 2, kind: input, shape index: {}]
  %s3 = inlined_call_operand.vmem [shape: f32[4], index: 3, kind: input, shape index: {}]
  %s4 = inlined_call_operand.vmem [shape: f32[1,16,1], index: 4, kind: input, shape index: {}]
  %s5 = inlined_call_operand.vmem [shape: f32[20], index: 5, kind: input, shape index: {}]
  %s6 = inlined_call_operand.vmem [shape: f32[1,16,1], index: 6, kind: input, shape index: {}]
  %s7 = inlined_call_operand.vmem [shape: f32[12], index: 7, kind: input, shape index: {}]
  %s8 = inlined_call_operand.vmem [shape: f32[1,16,1], index: 8, kind: input, shape index: {}]
  %s9 = inlined_call_operand.vmem [shape: f32[3], index: 9, kind: input, shape index: {}]
  %s10 = inlined_call_operand.vmem [shape: f32[1,16,1], index: 10, kind: input, shape index: {}]
  %s11 = inlined_call_operand.hbm [shape: f32[4,16,128], index: 11, kind: output, shape index: {}]
  %s12 = sld [smem:[#allocation0]]
  $region74: #{tpu_custom_call.1} parent=0
    _
  %s14 = ssub.s32 1, %s12
  %s15 = scalar_select 0, %s14, %s12
  $region1: #{tpu_custom_call.1} parent=0
    #allocation3 [shape = 'u8[512]{0}', space=smem, size = 0x200, scoped, tag = 'input window, operand 1, single buffered']
    #allocation4 [shape = 's32[1]{0}', space=sflag, size = 0x4, scoped, tag = 'scoped memory for tpu_custom_call.1']
    #allocation5 [shape = 's32[1]{0}', space=sflag, size = 0x4, scoped, tag = 'scoped memory for tpu_custom_call.1']
    #allocation6 [shape = 'u8[512]{0}', space=smem, size = 0x200, scoped, tag = 'input window, operand 3, single buffered']
    #allocation7 [shape = 's32[1]{0}', space=sflag, size = 0x4, scoped, tag = 'scoped memory for tpu_custom_call.1']
    #allocation8 [shape = 'u8[512]{0}', space=smem, size = 0x200, scoped, tag = 'input window, operand 5, single buffered']
    #allocation9 [shape = 'u8[512]{0}', space=smem, size = 0x200, scoped, tag = 'input window, operand 7, single buffered']
    #allocation10 [shape = 's32[1]{0}', space=sflag, size = 0x4, scoped, tag = 'scoped memory for tpu_custom_call.1']
    #allocation11 [shape = 'u8[512]{0}', space=smem, size = 0x200, scoped, tag = 'input window, operand 9, single buffered']
    #allocation12 [shape = 'u8[32768]{0}', space=vmem, size = 0x8000, scoped, tag = 'output window, operand 0, single buffered']
    %16 = vsyncpa [#allocation5], 0
    %17 = vsyncpa [#allocation7], 0
    %18 = vsyncpa [#allocation10], 0
    %19 = vsyncpa [#allocation4], 0
    // Predicated region
    $region2: #{tpu_custom_call.1} parent=1 // pred_check
      _
    $region3: #{tpu_custom_call.1} parent=1 // pred_check_branch
      %21 = sbr.rel (0) target = $region5
    $region4: #{tpu_custom_call.1} parent=1 // pred_region
      _
    $region5: #{tpu_custom_call.1} parent=1 // pred_fallthru
      _
    // Predicated region
    $region6: #{tpu_custom_call.1} parent=1 // pred_check
      _
    $region7: #{tpu_custom_call.1} parent=1 // pred_check_branch
      %23 = sbr.rel (0) target = $region9
    $region8: #{tpu_custom_call.1} parent=1 // pred_region
      %s25 = ssub.s32 16, 16
      %26 = vsyncadd [#allocation5], %s25
      %s28 = sshll.u32 %s1, 4
      %s29 = int_to_ptr.vmem [resolvable:$true] %s28
      %31 = dma.vmem_to_smem %s29, 16, [#allocation3], [#allocation5]
    $region9: #{tpu_custom_call.1} parent=1 // pred_fallthru
      _
    // Predicated region
    $region10: #{tpu_custom_call.1} parent=1 // pred_check
      _
    $region11: #{tpu_custom_call.1} parent=1 // pred_check_branch
      %33 = sbr.rel (0) target = $region13
    $region12: #{tpu_custom_call.1} parent=1 // pred_region
      _
    $region13: #{tpu_custom_call.1} parent=1 // pred_fallthru
      _
    // Predicated region
    $region14: #{tpu_custom_call.1} parent=1 // pred_check
      _
    $region15: #{tpu_custom_call.1} parent=1 // pred_check_branch
      %35 = sbr.rel (0) target = $region17
    $region16: #{tpu_custom_call.1} parent=1 // pred_region
      %s37 = ssub.s32 16, 16
      %38 = vsyncadd [#allocation7], %s37
      %s40 = sshll.u32 %s3, 4
      %s41 = int_to_ptr.vmem [resolvable:$true] %s40
      %43 = dma.vmem_to_smem %s41, 16, [#allocation6], [#allocation7]
    $region17: #{tpu_custom_call.1} parent=1 // pred_fallthru
      _
    // Predicated region
    $region18: #{tpu_custom_call.1} parent=1 // pred_check
      _
    $region19: #{tpu_custom_call.1} parent=1 // pred_check_branch
      %45 = sbr.rel (0) target = $region21
    $region20: #{tpu_custom_call.1} parent=1 // pred_region
      _
    $region21: #{tpu_custom_call.1} parent=1 // pred_fallthru
      _
    // Predicated region
    $region22: #{tpu_custom_call.1} parent=1 // pred_check
      _
    $region23: #{tpu_custom_call.1} parent=1 // pred_check_branch
      %47 = sbr.rel (0) target = $region25
    $region24: #{tpu_custom_call.1} parent=1 // pred_region
      %s49 = ssub.s32 16, 16
      %50 = vsyncadd [#allocation7], %s49
      %s52 = sshll.u32 %s5, 4
      %s53 = int_to_ptr.vmem [resolvable:$true] %s52
      %55 = dma.vmem_to_smem %s53, 16, [#allocation8], [#allocation7]
    $region25: #{tpu_custom_call.1} parent=1 // pred_fallthru
      _
    // Predicated region
    $region26: #{tpu_custom_call.1} parent=1 // pred_check
      _
    $region27: #{tpu_custom_call.1} parent=1 // pred_check_branch
      %57 = sbr.rel (0) target = $region29
    $region28: #{tpu_custom_call.1} parent=1 // pred_region
      _
    $region29: #{tpu_custom_call.1} parent=1 // pred_fallthru
      _
    // Predicated region
    $region30: #{tpu_custom_call.1} parent=1 // pred_check
      _
    $region31: #{tpu_custom_call.1} parent=1 // pred_check_branch
      %59 = sbr.rel (0) target = $region33
    $region32: #{tpu_custom_call.1} parent=1 // pred_region
      %s61 = ssub.s32 16, 16
      %62 = vsyncadd [#allocation10], %s61
      %s64 = sshll.u32 %s7, 4
      %s65 = int_to_ptr.vmem [resolvable:$true] %s64
      %67 = dma.vmem_to_smem %s65, 16, [#allocation9], [#allocation10]
    $region33: #{tpu_custom_call.1} parent=1 // pred_fallthru
      _
    // Predicated region
    $region34: #{tpu_custom_call.1} parent=1 // pred_check
      _
    $region35: #{tpu_custom_call.1} parent=1 // pred_check_branch
      %69 = sbr.rel (0) target = $region37
    $region36: #{tpu_custom_call.1} parent=1 // pred_region
      _
    $region37: #{tpu_custom_call.1} parent=1 // pred_fallthru
      _
    // Predicated region
    $region38: #{tpu_custom_call.1} parent=1 // pred_check
      _
    $region39: #{tpu_custom_call.1} parent=1 // pred_check_branch
      %71 = sbr.rel (0) target = $region41
    $region40: #{tpu_custom_call.1} parent=1 // pred_region
      %s73 = ssub.s32 16, 16
      %74 = vsyncadd [#allocation10], %s73
      %s76 = sshll.u32 %s9, 4
      %s77 = int_to_ptr.vmem [resolvable:$true] %s76
      %79 = dma.vmem_to_smem %s77, 16, [#allocation11], [#allocation10]
    $region41: #{tpu_custom_call.1} parent=1 // pred_fallthru
      _
    // Predicated region
    $region42: #{tpu_custom_call.1} parent=1 // pred_check
      _
    $region43: #{tpu_custom_call.1} parent=1 // pred_check_branch
      %81 = sbr.rel (0) target = $region45
    $region44: #{tpu_custom_call.1} parent=1 // pred_region
      _
    $region45: #{tpu_custom_call.1} parent=1 // pred_fallthru
      _
    // Predicated region
    $region46: #{tpu_custom_call.1} parent=1 // pred_check
      _
    $region47: #{tpu_custom_call.1} parent=1 // pred_check_branch
      %83 = sbr.rel (0) target = $region49
    $region48: #{tpu_custom_call.1} parent=1 // pred_region
      %84 = dma.done [#allocation5], 16
    $region49: #{tpu_custom_call.1} parent=1 // pred_fallthru
      _
    // Predicated region
    $region50: #{tpu_custom_call.1} parent=1 // pred_check
      _
    $region51: #{tpu_custom_call.1} parent=1 // pred_check_branch
      %86 = sbr.rel (0) target = $region53
    $region52: #{tpu_custom_call.1} parent=1 // pred_region
      %87 = dma.done [#allocation7], 16
    $region53: #{tpu_custom_call.1} parent=1 // pred_fallthru
      _
    // Predicated region
    $region54: #{tpu_custom_call.1} parent=1 // pred_check
      _
    $region55: #{tpu_custom_call.1} parent=1 // pred_check_branch
      %89 = sbr.rel (0) target = $region57
    $region56: #{tpu_custom_call.1} parent=1 // pred_region
      %90 = dma.done [#allocation7], 16
    $region57: #{tpu_custom_call.1} parent=1 // pred_fallthru
      _
    // Predicated region
    $region58: #{tpu_custom_call.1} parent=1 // pred_check
      _
    $region59: #{tpu_custom_call.1} parent=1 // pred_check_branch
      %92 = sbr.rel (0) target = $region61
    $region60: #{tpu_custom_call.1} parent=1 // pred_region
      %93 = dma.done [#allocation10], 16
    $region61: #{tpu_custom_call.1} parent=1 // pred_fallthru
      _
    // Predicated region
    $region62: #{tpu_custom_call.1} parent=1 // pred_check
      _
    $region63: #{tpu_custom_call.1} parent=1 // pred_check_branch
      %95 = sbr.rel (0) target = $region65
    $region64: #{tpu_custom_call.1} parent=1 // pred_region
      %96 = dma.done [#allocation10], 16
    $region65: #{tpu_custom_call.1} parent=1 // pred_fallthru
      _
    %97 = sfence
    %98 = vst [vmem:[#allocation2] sm:$0x3] 0.0
    %99 = vst [vmem:[#allocation2 + $0x12] sm:$0x3] 0.0
    %s100 = scalar_lea.vmem [#allocation2], 24
    %101 = vst [vmem:[%s100] sm:$0x3] 0.0
    %102 = vst [vmem:[%s100 + $0x12] sm:$0x3] 0.0
    %s103 = scalar_lea.vmem [#allocation2], 48
    %104 = vst [vmem:[%s103] sm:$0x3] 0.0
    %105 = vst [vmem:[%s103 + $0x12] sm:$0x3] 0.0
    %s106 = scalar_lea.vmem [#allocation2], 72
    %107 = vst [vmem:[%s106] sm:$0x3] 0.0
    %108 = vst [vmem:[%s106 + $0x12] sm:$0x3] 0.0
    %s109 = scalar_lea.vmem [#allocation2], 96
    %110 = vst [vmem:[%s109] sm:$0x3] 0.0
    %111 = vst [vmem:[%s109 + $0x12] sm:$0x3] 0.0
    %v112 = vld [vmem:[%s0] sm:$0xff]
    %v113 = vld [vmem:[%s0 + $0x8] sm:$0xff]
    %114 = vst [vmem:[#allocation2 + $0x2] sm:$0xff] %v112
    %115 = vst [vmem:[#allocation2 + $0xa] sm:$0xff] %v113
    %s116 = scalar_lea.vmem %s0, 16
    %v117 = vld [vmem:[%s116] sm:$0xff]
    %v118 = vld [vmem:[%s116 + $0x8] sm:$0xff]
    %119 = vst [vmem:[%s100 + $0x2] sm:$0xff] %v117
    %120 = vst [vmem:[%s100 + $0xa] sm:$0xff] %v118
    %s121 = scalar_lea.vmem %s0, 32
    %v122 = vld [vmem:[%s121] sm:$0xff]
    %v123 = vld [vmem:[%s121 + $0x8] sm:$0xff]
    %124 = vst [vmem:[%s103 + $0x2] sm:$0xff] %v122
    %125 = vst [vmem:[%s103 + $0xa] sm:$0xff] %v123
    %s126 = scalar_lea.vmem %s0, 48
    %v127 = vld [vmem:[%s126] sm:$0xff]
    %v128 = vld [vmem:[%s126 + $0x8] sm:$0xff]
    %129 = vst [vmem:[%s106 + $0x2] sm:$0xff] %v127
    %130 = vst [vmem:[%s106 + $0xa] sm:$0xff] %v128
    %v131 = vld [vmem:[#allocation2 + $0x1] sm:$0xff]
    %v132 = vld [vmem:[#allocation2 + $0x9] sm:$0xff]
    %s133 = sld [smem:[#allocation3]]
    %v134 = vstv %s133
    %v135 = vmul.f32 %v134, %v131
    %v136 = vmul.f32 %v134, %v132
    %v137 = vadd.f32 %v135, 0.0
    %v138 = vadd.f32 %v136, 0.0
    %v139 = vld [vmem:[#allocation2 + $0x2] sm:$0xff]
    %v140 = vld [vmem:[#allocation2 + $0xa] sm:$0xff]
    %s141 = sld [smem:[#allocation3 + $0x1]]
    %v142 = vstv %s141
    %v143 = vmul.f32 %v142, %v139
    %v144 = vmul.f32 %v142, %v140
    %v145 = vadd.f32 %v137, %v143
    %v146 = vadd.f32 %v138, %v144
    %v147 = vld [vmem:[#allocation2 + $0x3] sm:$0xff]
    %v148 = vld [vmem:[#allocation2 + $0xb] sm:$0xff]
    %s149 = sld [smem:[#allocation3 + $0x2]]
    %v150 = vstv %s149
    %v151 = vmul.f32 %v150, %v147
    %v152 = vmul.f32 %v150, %v148
    %v153 = vadd.f32 %v145, %v151
    %v154 = vadd.f32 %v146, %v152
    %v155 = vld [vmem:[%s100 + $0x1] sm:$0xff]
    %v156 = vld [vmem:[%s100 + $0x9] sm:$0xff]
    %s157 = sld [smem:[#allocation3 + $0x3]]
    %v158 = vstv %s157
    %v159 = vmul.f32 %v158, %v155
    %v160 = vmul.f32 %v158, %v156
    %v161 = vadd.f32 %v153, %v159
    %v162 = vadd.f32 %v154, %v160
    %v163 = vld [vmem:[%s100 + $0x2] sm:$0xff]
    %v164 = vld [vmem:[%s100 + $0xa] sm:$0xff]
    %s165 = sld [smem:[#allocation3 + $0x4]]
    %v166 = vstv %s165
    %v167 = vmul.f32 %v166, %v163
    %v168 = vmul.f32 %v166, %v164
    %v169 = vadd.f32 %v161, %v167
    %v170 = vadd.f32 %v162, %v168
    %v171 = vld [vmem:[%s100 + $0x3] sm:$0xff]
    %v172 = vld [vmem:[%s100 + $0xb] sm:$0xff]
    %s173 = sld [smem:[#allocation3 + $0x5]]
    %v174 = vstv %s173
    %v175 = vmul.f32 %v174, %v171
    %v176 = vmul.f32 %v174, %v172
    %v177 = vadd.f32 %v169, %v175
    %v178 = vadd.f32 %v170, %v176
    %v179 = vld [vmem:[%s103 + $0x1] sm:$0xff]
    %v180 = vld [vmem:[%s103 + $0x9] sm:$0xff]
    %s181 = sld [smem:[#allocation3 + $0x6]]
    %v182 = vstv %s181
    %v183 = vmul.f32 %v182, %v179
    %v184 = vmul.f32 %v182, %v180
    %v185 = vadd.f32 %v177, %v183
    %v186 = vadd.f32 %v178, %v184
    %v187 = vld [vmem:[%s103 + $0x2] sm:$0xff]
    %v188 = vld [vmem:[%s103 + $0xa] sm:$0xff]
    %s189 = sld [smem:[#allocation3 + $0x7]]
    %v190 = vstv %s189
    %v191 = vmul.f32 %v190, %v187
    %v192 = vmul.f32 %v190, %v188
    %v193 = vadd.f32 %v185, %v191
    %v194 = vadd.f32 %v186, %v192
    %v195 = vld [vmem:[%s103 + $0x3] sm:$0xff]
    %v196 = vld [vmem:[%s103 + $0xb] sm:$0xff]
    %s197 = sld [smem:[#allocation3 + $0x8]]
    %v198 = vstv %s197
    %v199 = vmul.f32 %v198, %v195
    %v200 = vmul.f32 %v198, %v196
    %v201 = vadd.f32 %v193, %v199
    %v202 = vadd.f32 %v194, %v200
    %v203 = vld [vmem:[%s106 + $0x1] sm:$0xff]
    %v204 = vld [vmem:[%s106 + $0x9] sm:$0xff]
    %s205 = sld [smem:[#allocation3 + $0x9]]
    %v206 = vstv %s205
    %v207 = vmul.f32 %v206, %v203
    %v208 = vmul.f32 %v206, %v204
    %v209 = vadd.f32 %v201, %v207
    %v210 = vadd.f32 %v202, %v208
    %v211 = vld [vmem:[%s106 + $0x2] sm:$0xff]
    %v212 = vld [vmem:[%s106 + $0xa] sm:$0xff]
    %s213 = sld [smem:[#allocation3 + $0xa]]
    %v214 = vstv %s213
    %v215 = vmul.f32 %v214, %v211
    %v216 = vmul.f32 %v214, %v212
    %v217 = vadd.f32 %v209, %v215
    %v218 = vadd.f32 %v210, %v216
    %v219 = vld [vmem:[%s106 + $0x3] sm:$0xff]
    %v220 = vld [vmem:[%s106 + $0xb] sm:$0xff]
    %s221 = sld [smem:[#allocation3 + $0xb]]
    %v222 = vstv %s221
    %v223 = vmul.f32 %v222, %v219
    %v224 = vmul.f32 %v222, %v220
    %v225 = vadd.f32 %v217, %v223
    %v226 = vadd.f32 %v218, %v224
    %v227 = vld [vmem:[%s2] sm:$0xff]
    %v228 = vld [vmem:[%s2 + $0x8] sm:$0xff]
    %230 = vset.pattern.permute.xlu0 0
    %231 = vperm.xlu0 %230, %v227
    %v232 = vpop.permute.xlu0 %231
    %235 = vset.pattern.permute.xlu0 0
    %236 = vperm.xlu0 %235, %v228
    %v237 = vpop.permute.xlu0 %236
    %v239 = vadd.f32 %v225, %v232
    %v240 = vadd.f32 %v226, %v237
    %v241 = vld [vmem:[%s0] sm:$0xff]
    %v242 = vld [vmem:[%s0 + $0x8] sm:$0xff]
    %v243 = vadd.f32 %v239, %v241
    %v244 = vadd.f32 %v240, %v242
    %v245 = vmax.f32 %v243, 0.0
    %v246 = vmax.f32 %v244, 0.0
    %247 = vst [vmem:[#allocation12] sm:$0xff] %v245
    %248 = vst [vmem:[#allocation12 + $0x8] sm:$0xff] %v246
    %v249 = vld [vmem:[#allocation2 + $0x2] sm:$0xff]
    %v250 = vld [vmem:[#allocation2 + $0xa] sm:$0xff]
    %s251 = sld [smem:[#allocation6]]
    %v252 = vstv %s251
    %v253 = vmul.f32 %v252, %v249
    %v254 = vmul.f32 %v252, %v250
    %v255 = vadd.f32 %v253, 0.0
    %v256 = vadd.f32 %v254, 0.0
    %v257 = vld [vmem:[%s100 + $0x2] sm:$0xff]
    %v258 = vld [vmem:[%s100 + $0xa] sm:$0xff]
    %s259 = sld [smem:[#allocation6 + $0x1]]
    %v260 = vstv %s259
    %v261 = vmul.f32 %v260, %v257
    %v262 = vmul.f32 %v260, %v258
    %v263 = vadd.f32 %v255, %v261
    %v264 = vadd.f32 %v256, %v262
    %v265 = vld [vmem:[%s103 + $0x2] sm:$0xff]
    %v266 = vld [vmem:[%s103 + $0xa] sm:$0xff]
    %s267 = sld [smem:[#allocation6 + $0x2]]
    %v268 = vstv %s267
    %v269 = vmul.f32 %v268, %v265
    %v270 = vmul.f32 %v268, %v266
    %v271 = vadd.f32 %v263, %v269
    %v272 = vadd.f32 %v264, %v270
    %v273 = vld [vmem:[%s106 + $0x2] sm:$0xff]
    %v274 = vld [vmem:[%s106 + $0xa] sm:$0xff]
    %s275 = sld [smem:[#allocation6 + $0x3]]
    %v276 = vstv %s275
    %v277 = vmul.f32 %v276, %v273
    %v278 = vmul.f32 %v276, %v274
    %v279 = vadd.f32 %v271, %v277
    %v280 = vadd.f32 %v272, %v278
    %v281 = vld [vmem:[%s4] sm:$0xff]
    %v282 = vld [vmem:[%s4 + $0x8] sm:$0xff]
    %284 = vset.pattern.permute.xlu0 0
    %285 = vperm.xlu0 %284, %v281
    %v286 = vpop.permute.xlu0 %285
    %289 = vset.pattern.permute.xlu0 0
    %290 = vperm.xlu0 %289, %v282
    %v291 = vpop.permute.xlu0 %290
    %v293 = vadd.f32 %v279, %v286
    %v294 = vadd.f32 %v280, %v291
    %v295 = vld [vmem:[%s116] sm:$0xff]
    %v296 = vld [vmem:[%s116 + $0x8] sm:$0xff]
    %v297 = vadd.f32 %v293, %v295
    %v298 = vadd.f32 %v294, %v296
    %v299 = vmax.f32 %v297, 0.0
    %v300 = vmax.f32 %v298, 0.0
    %s301 = scalar_lea.vmem [#allocation12], 16
    %302 = vst [vmem:[%s301] sm:$0xff] %v299
    %303 = vst [vmem:[%s301 + $0x8] sm:$0xff] %v300
    %v304 = vld [vmem:[#allocation2] sm:$0xff]
    %v305 = vld [vmem:[#allocation2 + $0x8] sm:$0xff]
    %s306 = sld [smem:[#allocation8]]
    %v307 = vstv %s306
    %v308 = vmul.f32 %v307, %v304
    %v309 = vmul.f32 %v307, %v305
    %v310 = vadd.f32 %v308, 0.0
    %v311 = vadd.f32 %v309, 0.0
    %v312 = vld [vmem:[#allocation2 + $0x1] sm:$0xff]
    %v313 = vld [vmem:[#allocation2 + $0x9] sm:$0xff]
    %s314 = sld [smem:[#allocation8 + $0x1]]
    %v315 = vstv %s314
    %v316 = vmul.f32 %v315, %v312
    %v317 = vmul.f32 %v315, %v313
    %v318 = vadd.f32 %v310, %v316
    %v319 = vadd.f32 %v311, %v317
    %v320 = vld [vmem:[#allocation2 + $0x2] sm:$0xff]
    %v321 = vld [vmem:[#allocation2 + $0xa] sm:$0xff]
    %s322 = sld [smem:[#allocation8 + $0x2]]
    %v323 = vstv %s322
    %v324 = vmul.f32 %v323, %v320
    %v325 = vmul.f32 %v323, %v321
    %v326 = vadd.f32 %v318, %v324
    %v327 = vadd.f32 %v319, %v325
    %v328 = vld [vmem:[#allocation2 + $0x3] sm:$0xff]
    %v329 = vld [vmem:[#allocation2 + $0xb] sm:$0xff]
    %s330 = sld [smem:[#allocation8 + $0x3]]
    %v331 = vstv %s330
    %v332 = vmul.f32 %v331, %v328
    %v333 = vmul.f32 %v331, %v329
    %v334 = vadd.f32 %v326, %v332
    %v335 = vadd.f32 %v327, %v333
    %v336 = vld [vmem:[#allocation2 + $0x4] sm:$0xff]
    %v337 = vld [vmem:[#allocation2 + $0xc] sm:$0xff]
    %s338 = sld [smem:[#allocation8 + $0x4]]
    %v339 = vstv %s338
    %v340 = vmul.f32 %v339, %v336
    %v341 = vmul.f32 %v339, %v337
    %v342 = vadd.f32 %v334, %v340
    %v343 = vadd.f32 %v335, %v341
    %v344 = vld [vmem:[%s100] sm:$0xff]
    %v345 = vld [vmem:[%s100 + $0x8] sm:$0xff]
    %s346 = sld [smem:[#allocation8 + $0x5]]
    %v347 = vstv %s346
    %v348 = vmul.f32 %v347, %v344
    %v349 = vmul.f32 %v347, %v345
    %v350 = vadd.f32 %v342, %v348
    %v351 = vadd.f32 %v343, %v349
    %v352 = vld [vmem:[%s100 + $0x1] sm:$0xff]
    %v353 = vld [vmem:[%s100 + $0x9] sm:$0xff]
    %s354 = sld [smem:[#allocation8 + $0x6]]
    %v355 = vstv %s354
    %v356 = vmul.f32 %v355, %v352
    %v357 = vmul.f32 %v355, %v353
    %v358 = vadd.f32 %v350, %v356
    %v359 = vadd.f32 %v351, %v357
    %v360 = vld [vmem:[%s100 + $0x2] sm:$0xff]
    %v361 = vld [vmem:[%s100 + $0xa] sm:$0xff]
    %s362 = sld [smem:[#allocation8 + $0x7]]
    %v363 = vstv %s362
    %v364 = vmul.f32 %v363, %v360
    %v365 = vmul.f32 %v363, %v361
    %v366 = vadd.f32 %v358, %v364
    %v367 = vadd.f32 %v359, %v365
    %v368 = vld [vmem:[%s100 + $0x3] sm:$0xff]
    %v369 = vld [vmem:[%s100 + $0xb] sm:$0xff]
    %s370 = sld [smem:[#allocation8 + $0x8]]
    %v371 = vstv %s370
    %v372 = vmul.f32 %v371, %v368
    %v373 = vmul.f32 %v371, %v369
    %v374 = vadd.f32 %v366, %v372
    %v375 = vadd.f32 %v367, %v373
    %v376 = vld [vmem:[%s100 + $0x4] sm:$0xff]
    %v377 = vld [vmem:[%s100 + $0xc] sm:$0xff]
    %s378 = sld [smem:[#allocation8 + $0x9]]
    %v379 = vstv %s378
    %v380 = vmul.f32 %v379, %v376
    %v381 = vmul.f32 %v379, %v377
    %v382 = vadd.f32 %v374, %v380
    %v383 = vadd.f32 %v375, %v381
    %v384 = vld [vmem:[%s103] sm:$0xff]
    %v385 = vld [vmem:[%s103 + $0x8] sm:$0xff]
    %s386 = sld [smem:[#allocation8 + $0xa]]
    %v387 = vstv %s386
    %v388 = vmul.f32 %v387, %v384
    %v389 = vmul.f32 %v387, %v385
    %v390 = vadd.f32 %v382, %v388
    %v391 = vadd.f32 %v383, %v389
    %v392 = vld [vmem:[%s103 + $0x1] sm:$0xff]
    %v393 = vld [vmem:[%s103 + $0x9] sm:$0xff]
    %s394 = sld [smem:[#allocation8 + $0xb]]
    %v395 = vstv %s394
    %v396 = vmul.f32 %v395, %v392
    %v397 = vmul.f32 %v395, %v393
    %v398 = vadd.f32 %v390, %v396
    %v399 = vadd.f32 %v391, %v397
    %v400 = vld [vmem:[%s103 + $0x2] sm:$0xff]
    %v401 = vld [vmem:[%s103 + $0xa] sm:$0xff]
    %s402 = sld [smem:[#allocation8 + $0xc]]
    %v403 = vstv %s402
    %v404 = vmul.f32 %v403, %v400
    %v405 = vmul.f32 %v403, %v401
    %v406 = vadd.f32 %v398, %v404
    %v407 = vadd.f32 %v399, %v405
    %v408 = vld [vmem:[%s103 + $0x3] sm:$0xff]
    %v409 = vld [vmem:[%s103 + $0xb] sm:$0xff]
    %s410 = sld [smem:[#allocation8 + $0xd]]
    %v411 = vstv %s410
    %v412 = vmul.f32 %v411, %v408
    %v413 = vmul.f32 %v411, %v409
    %v414 = vadd.f32 %v406, %v412
    %v415 = vadd.f32 %v407, %v413
    %v416 = vld [vmem:[%s103 + $0x4] sm:$0xff]
    %v417 = vld [vmem:[%s103 + $0xc] sm:$0xff]
    %s418 = sld [smem:[#allocation8 + $0xe]]
    %v419 = vstv %s418
    %v420 = vmul.f32 %v419, %v416
    %v421 = vmul.f32 %v419, %v417
    %v422 = vadd.f32 %v414, %v420
    %v423 = vadd.f32 %v415, %v421
    %v424 = vld [vmem:[%s106] sm:$0xff]
    %v425 = vld [vmem:[%s106 + $0x8] sm:$0xff]
    %s426 = sld [smem:[#allocation8 + $0xf]]
    %v427 = vstv %s426
    %v428 = vmul.f32 %v427, %v424
    %v429 = vmul.f32 %v427, %v425
    %v430 = vadd.f32 %v422, %v428
    %v431 = vadd.f32 %v423, %v429
    %v432 = vld [vmem:[%s106 + $0x1] sm:$0xff]
    %v433 = vld [vmem:[%s106 + $0x9] sm:$0xff]
    %s434 = sld [smem:[#allocation8 + $0x10]]
    %v435 = vstv %s434
    %v436 = vmul.f32 %v435, %v432
    %v437 = vmul.f32 %v435, %v433
    %v438 = vadd.f32 %v430, %v436
    %v439 = vadd.f32 %v431, %v437
    %v440 = vld [vmem:[%s106 + $0x2] sm:$0xff]
    %v441 = vld [vmem:[%s106 + $0xa] sm:$0xff]
    %s442 = sld [smem:[#allocation8 + $0x11]]
    %v443 = vstv %s442
    %v444 = vmul.f32 %v443, %v440
    %v445 = vmul.f32 %v443, %v441
    %v446 = vadd.f32 %v438, %v444
    %v447 = vadd.f32 %v439, %v445
    %v448 = vld [vmem:[%s106 + $0x3] sm:$0xff]
    %v449 = vld [vmem:[%s106 + $0xb] sm:$0xff]
    %s450 = sld [smem:[#allocation8 + $0x12]]
    %v451 = vstv %s450
    %v452 = vmul.f32 %v451, %v448
    %v453 = vmul.f32 %v451, %v449
    %v454 = vadd.f32 %v446, %v452
    %v455 = vadd.f32 %v447, %v453
    %v456 = vld [vmem:[%s106 + $0x4] sm:$0xff]
    %v457 = vld [vmem:[%s106 + $0xc] sm:$0xff]
    %s458 = sld [smem:[#allocation8 + $0x13]]
    %v459 = vstv %s458
    %v460 = vmul.f32 %v459, %v456
    %v461 = vmul.f32 %v459, %v457
    %v462 = vadd.f32 %v454, %v460
    %v463 = vadd.f32 %v455, %v461
    %v464 = vld [vmem:[%s6] sm:$0xff]
    %v465 = vld [vmem:[%s6 + $0x8] sm:$0xff]
    %467 = vset.pattern.permute.xlu0 0
    %468 = vperm.xlu0 %467, %v464
    %v469 = vpop.permute.xlu0 %468
    %472 = vset.pattern.permute.xlu0 0
    %473 = vperm.xlu0 %472, %v465
    %v474 = vpop.permute.xlu0 %473
    %v476 = vadd.f32 %v462, %v469
    %v477 = vadd.f32 %v463, %v474
    %v478 = vld [vmem:[%s121] sm:$0xff]
    %v479 = vld [vmem:[%s121 + $0x8] sm:$0xff]
    %v480 = vadd.f32 %v476, %v478
    %v481 = vadd.f32 %v477, %v479
    %v482 = vmax.f32 %v480, 0.0
    %v483 = vmax.f32 %v481, 0.0
    %s484 = scalar_lea.vmem [#allocation12], 32
    %485 = vst [vmem:[%s484] sm:$0xff] %v482
    %486 = vst [vmem:[%s484 + $0x8] sm:$0xff] %v483
    %v487 = vld [vmem:[#allocation2 + $0x1] sm:$0xff]
    %v488 = vld [vmem:[#allocation2 + $0x9] sm:$0xff]
    %s489 = sld [smem:[#allocation9]]
    %v490 = vstv %s489
    %v491 = vmul.f32 %v490, %v487
    %v492 = vmul.f32 %v490, %v488
    %v493 = vadd.f32 %v491, 0.0
    %v494 = vadd.f32 %v492, 0.0
    %v495 = vld [vmem:[#allocation2 + $0x2] sm:$0xff]
    %v496 = vld [vmem:[#allocation2 + $0xa] sm:$0xff]
    %s497 = sld [smem:[#allocation9 + $0x1]]
    %v498 = vstv %s497
    %v499 = vmul.f32 %v498, %v495
    %v500 = vmul.f32 %v498, %v496
    %v501 = vadd.f32 %v493, %v499
    %v502 = vadd.f32 %v494, %v500
    %v503 = vld [vmem:[#allocation2 + $0x3] sm:$0xff]
    %v504 = vld [vmem:[#allocation2 + $0xb] sm:$0xff]
    %s505 = sld [smem:[#allocation9 + $0x2]]
    %v506 = vstv %s505
    %v507 = vmul.f32 %v506, %v503
    %v508 = vmul.f32 %v506, %v504
    %v509 = vadd.f32 %v501, %v507
    %v510 = vadd.f32 %v502, %v508
    %v511 = vld [vmem:[%s100 + $0x1] sm:$0xff]
    %v512 = vld [vmem:[%s100 + $0x9] sm:$0xff]
    %s513 = sld [smem:[#allocation9 + $0x3]]
    %v514 = vstv %s513
    %v515 = vmul.f32 %v514, %v511
    %v516 = vmul.f32 %v514, %v512
    %v517 = vadd.f32 %v509, %v515
    %v518 = vadd.f32 %v510, %v516
    %v519 = vld [vmem:[%s100 + $0x2] sm:$0xff]
    %v520 = vld [vmem:[%s100 + $0xa] sm:$0xff]
    %s521 = sld [smem:[#allocation9 + $0x4]]
    %v522 = vstv %s521
    %v523 = vmul.f32 %v522, %v519
    %v524 = vmul.f32 %v522, %v520
    %v525 = vadd.f32 %v517, %v523
    %v526 = vadd.f32 %v518, %v524
    %v527 = vld [vmem:[%s100 + $0x3] sm:$0xff]
    %v528 = vld [vmem:[%s100 + $0xb] sm:$0xff]
    %s529 = sld [smem:[#allocation9 + $0x5]]
    %v530 = vstv %s529
    %v531 = vmul.f32 %v530, %v527
    %v532 = vmul.f32 %v530, %v528
    %v533 = vadd.f32 %v525, %v531
    %v534 = vadd.f32 %v526, %v532
    %v535 = vld [vmem:[%s103 + $0x1] sm:$0xff]
    %v536 = vld [vmem:[%s103 + $0x9] sm:$0xff]
    %s537 = sld [smem:[#allocation9 + $0x6]]
    %v538 = vstv %s537
    %v539 = vmul.f32 %v538, %v535
    %v540 = vmul.f32 %v538, %v536
    %v541 = vadd.f32 %v533, %v539
    %v542 = vadd.f32 %v534, %v540
    %v543 = vld [vmem:[%s103 + $0x2] sm:$0xff]
    %v544 = vld [vmem:[%s103 + $0xa] sm:$0xff]
    %s545 = sld [smem:[#allocation9 + $0x7]]
    %v546 = vstv %s545
    %v547 = vmul.f32 %v546, %v543
    %v548 = vmul.f32 %v546, %v544
    %v549 = vadd.f32 %v541, %v547
    %v550 = vadd.f32 %v542, %v548
    %v551 = vld [vmem:[%s103 + $0x3] sm:$0xff]
    %v552 = vld [vmem:[%s103 + $0xb] sm:$0xff]
    %s553 = sld [smem:[#allocation9 + $0x8]]
    %v554 = vstv %s553
    %v555 = vmul.f32 %v554, %v551
    %v556 = vmul.f32 %v554, %v552
    %v557 = vadd.f32 %v549, %v555
    %v558 = vadd.f32 %v550, %v556
    %v559 = vld [vmem:[%s106 + $0x1] sm:$0xff]
    %v560 = vld [vmem:[%s106 + $0x9] sm:$0xff]
    %s561 = sld [smem:[#allocation9 + $0x9]]
    %v562 = vstv %s561
    %v563 = vmul.f32 %v562, %v559
    %v564 = vmul.f32 %v562, %v560
    %v565 = vadd.f32 %v557, %v563
    %v566 = vadd.f32 %v558, %v564
    %v567 = vld [vmem:[%s106 + $0x2] sm:$0xff]
    %v568 = vld [vmem:[%s106 + $0xa] sm:$0xff]
    %s569 = sld [smem:[#allocation9 + $0xa]]
    %v570 = vstv %s569
    %v571 = vmul.f32 %v570, %v567
    %v572 = vmul.f32 %v570, %v568
    %v573 = vadd.f32 %v565, %v571
    %v574 = vadd.f32 %v566, %v572
    %v575 = vld [vmem:[%s106 + $0x3] sm:$0xff]
    %v576 = vld [vmem:[%s106 + $0xb] sm:$0xff]
    %s577 = sld [smem:[#allocation9 + $0xb]]
    %v578 = vstv %s577
    %v579 = vmul.f32 %v578, %v575
    %v580 = vmul.f32 %v578, %v576
    %v581 = vadd.f32 %v573, %v579
    %v582 = vadd.f32 %v574, %v580
    %v583 = vld [vmem:[%s8] sm:$0xff]
    %v584 = vld [vmem:[%s8 + $0x8] sm:$0xff]
    %586 = vset.pattern.permute.xlu0 0
    %587 = vperm.xlu0 %586, %v583
    %v588 = vpop.permute.xlu0 %587
    %591 = vset.pattern.permute.xlu0 0
    %592 = vperm.xlu0 %591, %v584
    %v593 = vpop.permute.xlu0 %592
    %v595 = vadd.f32 %v581, %v588
    %v596 = vadd.f32 %v582, %v593
    %597 = vst [vmem:[%s109 + $0x2] sm:$0xff] %v595
    %598 = vst [vmem:[%s109 + $0xa] sm:$0xff] %v596
    %v599 = vld [vmem:[%s109 + $0x1] sm:$0xff]
    %v600 = vld [vmem:[%s109 + $0x9] sm:$0xff]
    %s601 = sld [smem:[#allocation11]]
    %v602 = vstv %s601
    %v603 = vmul.f32 %v602, %v599
    %v604 = vmul.f32 %v602, %v600
    %v605 = vadd.f32 %v603, 0.0
    %v606 = vadd.f32 %v604, 0.0
    %v607 = vld [vmem:[%s109 + $0x2] sm:$0xff]
    %v608 = vld [vmem:[%s109 + $0xa] sm:$0xff]
    %s609 = sld [smem:[#allocation11 + $0x1]]
    %v610 = vstv %s609
    %v611 = vmul.f32 %v610, %v607
    %v612 = vmul.f32 %v610, %v608
    %v613 = vadd.f32 %v605, %v611
    %v614 = vadd.f32 %v606, %v612
    %v615 = vld [vmem:[%s109 + $0x3] sm:$0xff]
    %v616 = vld [vmem:[%s109 + $0xb] sm:$0xff]
    %s617 = sld [smem:[#allocation11 + $0x2]]
    %v618 = vstv %s617
    %v619 = vmul.f32 %v618, %v615
    %v620 = vmul.f32 %v618, %v616
    %v621 = vadd.f32 %v613, %v619
    %v622 = vadd.f32 %v614, %v620
    %v623 = vld [vmem:[%s10] sm:$0xff]
    %v624 = vld [vmem:[%s10 + $0x8] sm:$0xff]
    %626 = vset.pattern.permute.xlu0 0
    %627 = vperm.xlu0 %626, %v623
    %v628 = vpop.permute.xlu0 %627
    %631 = vset.pattern.permute.xlu0 0
    %632 = vperm.xlu0 %631, %v624
    %v633 = vpop.permute.xlu0 %632
    %v635 = vadd.f32 %v621, %v628
    %v636 = vadd.f32 %v622, %v633
    %v637 = vld [vmem:[%s126] sm:$0xff]
    %v638 = vld [vmem:[%s126 + $0x8] sm:$0xff]
    %v639 = vadd.f32 %v635, %v637
    %v640 = vadd.f32 %v636, %v638
    %v641 = vmax.f32 %v639, 0.0
    %v642 = vmax.f32 %v640, 0.0
    %s643 = scalar_lea.vmem [#allocation12], 48
    %644 = vst [vmem:[%s643] sm:$0xff] %v641
    %645 = vst [vmem:[%s643 + $0x8] sm:$0xff] %v642
    // Predicated region
    $region66: #{tpu_custom_call.1} parent=1 // pred_check
      _
    $region67: #{tpu_custom_call.1} parent=1 // pred_check_branch
      %647 = sbr.rel (0) target = $region69
    $region68: #{tpu_custom_call.1} parent=1 // pred_region
      %s649 = ssub.s32 1024, 1024
      %650 = vsyncadd [#allocation4], %s649
      %s651 = sshll.u32 [#allocation12], 4
      %s652 = int_to_ptr.vmem [resolvable:$true] %s651
      %657 = dma.vmem_to_hbm [thread:$0]  %s652, 1024, %s11, [#allocation4], 128, 128, 8
    $region69: #{tpu_custom_call.1} parent=1 // pred_fallthru
      _
    // Predicated region
    $region70: #{tpu_custom_call.1} parent=1 // pred_check
      _
    $region71: #{tpu_custom_call.1} parent=1 // pred_check_branch
      %659 = sbr.rel (0) target = $region73
    $region72: #{tpu_custom_call.1} parent=1 // pred_region
      %660 = dma.done [#allocation4], 1024
    $region73: #{tpu_custom_call.1} parent=1 // pred_fallthru
      _
    %661 = vsyncpa [#allocation4], 1
    %662 = vsyncpa [#allocation5], 1
    %663 = vsyncpa [#allocation7], 1
    %664 = vsyncpa [#allocation10], 1

</llo_original>
